<compile_context>
chip_gen: v5e
topology: v5e:2x2
jax: 0.10.0
libtpu: 0.0.40
codegen_flags: <defaults>
</compile_context>

<pallas_src>
import functools

import jax
import jax.numpy as jnp
from jax.experimental import pallas as pl
from jax.experimental.pallas import tpu as pltpu

EPS = 1e-5  # nn.InstanceNorm2d default eps


# ----------------------------------------------------------------------------
# Hardware-aware tiling helpers
# ----------------------------------------------------------------------------
def _vmem_capacity_bytes():
    try:
        return int(pltpu.get_tpu_info().vmem_capacity_bytes)
    except Exception:
        return 64 * 1024 * 1024  # conservative default (v7x per-TC VMEM)


def _pick_co_tile(cout_p, vmem_cap):
    # Bigger lane-dense tiles on 128 MiB parts (v5e/v6e); 128 on 64 MiB v7x.
    if cout_p % 256 == 0 and vmem_cap >= 100 * 1024 * 1024:
        return 256
    if cout_p % 128 == 0:
        return 128
    return cout_p  # small Cout (<=128): single, possibly lane-masked tile


def _band_footprint_bytes(bh, W, cin, co_t, interm_bytes, out_bytes):
    """Rough per-grid-step VMEM demand (double-buffered blocks + in-kernel temps)."""
    wp, bhp = W + 2, bh + 2
    a_in = 2 * (bh * wp * cin * 2 + 2 * wp * cin * 2)          # band + 2 halo rows, bf16
    a_wt = 2 * (16 * cin * co_t * 2)                           # (4, 4*Cin, co_t) bf16
    a_out = 2 * (4 * bh * W * co_t * interm_bytes + 2 * co_t * 4)
    a_tmp = (bhp * wp * cin * 2                                # halo'd band value
             + 3 * bhp * W * cin * 2                           # column-shifted views
             + bh * W * 4 * cin * 2                            # K-concatenated operand
             + 2 * bh * W * co_t * 4)                          # f32 dot result / staging
    b_tot = 2 * 4 * bh * W * co_t * (interm_bytes + out_bytes) + 4 * co_t * 4
    return max(a_in + a_wt + a_out + a_tmp, b_tot)


def _pick_band_rows(H, W, cin, co_t, interm_bytes, out_bytes, vmem_cap, requested):
    if requested is not None:
        if H % requested != 0:
            raise ValueError(f"band_rows={requested} must divide H={H}")
        return requested
    budget = int(0.45 * vmem_cap)
    best = 1
    for bh in range(1, H + 1):
        if H % bh == 0 and _band_footprint_bytes(
                bh, W, cin, co_t, interm_bytes, out_bytes) <= budget:
            best = bh
    return best


# ----------------------------------------------------------------------------
# Kernel A: banded subpixel conv (upsample folded into the weights) + IN stats
# ----------------------------------------------------------------------------
def _subpixel_conv_stats_kernel(xm_ref, xh0_ref, xh1_ref, w_ref, raw_ref, stats_ref):
    # xm_ref   : (1, bh, W+2, Cin)   bf16  band rows of the zero-halo'd original input
    # xh0/xh1  : (1, 1, W+2, Cin)    bf16  the two halo rows just below the band
    # w_ref    : (4, 4*Cin, co_t)    bf16  subpixel-phase weights (taps concatenated on K)
    # raw_ref  : (1, 4, bh, W, co_t)       raw conv output, phase-separated (p = 2a+b)
    # stats_ref: (1, 2, co_t)        f32   [sum; sum of squares], accumulated over bands
    k = pl.program_id(2)

    @pl.when(k == 0)
    def _init():
        stats_ref[...] = jnp.zeros_like(stats_ref)

    bh = xm_ref.shape[1]
    cin = xm_ref.shape[3]
    w_dim = raw_ref.shape[3]
    co = raw_ref.shape[4]

    # Band of the zero-padded original-resolution input: rows [k*bh, k*bh + bh + 2).
    xb = jnp.concatenate([xm_ref[0], xh0_ref[0], xh1_ref[0]], axis=0)  # (bh+2, W+2, Cin)
    # Three column-shifted views, shared by all 16 (phase, tap) combinations.
    xc = [xb[:, c:c + w_dim, :] for c in range(3)]                     # (bh+2, W, Cin)

    ssum = jnp.zeros((1, co), jnp.float32)
    ssq = jnp.zeros((1, co), jnp.float32)
    for a in range(2):            # output row phase
        for b in range(2):        # output column phase
            # 2x2 taps for this phase, concatenated along K -> one MXU dot (K = 4*Cin).
            taps = [xc[b + rw][a + rh:a + rh + bh]
                    for rh in range(2) for rw in range(2)]             # 4 x (bh, W, Cin)
            op = jnp.concatenate(taps, axis=-1).reshape(bh * w_dim, 4 * cin)
            r = jnp.dot(op, w_ref[2 * a + b],
                        preferred_element_type=jnp.float32)            # (bh*W, co) f32
            raw_ref[0, 2 * a + b] = r.reshape(bh, w_dim, co).astype(raw_ref.dtype)
            # Single-pass InstanceNorm statistics in f32 (no conv bias -> small means,
            # so the E[x^2]-E[x]^2 cancellation stays benign; guarded in the finalize).
            ssum = ssum + jnp.sum(r, axis=0, keepdims=True)
            ssq = ssq + jnp.sum(r * r, axis=0, keepdims=True)

    stats_ref[0] += jnp.concatenate([ssum, ssq], axis=0)


# ----------------------------------------------------------------------------
# Kernel B: banded InstanceNorm(affine) + ReLU finalize (pure elementwise)
# ----------------------------------------------------------------------------
def _instnorm_relu_kernel(raw_ref, stats_ref, g_ref, bt_ref, o_ref, *, eps, inv_n):
    st = stats_ref[0]                                        # (2, co) f32
    mean = st[0:1] * inv_n                                   # (1, co)
    var = jnp.maximum(st[1:2] * inv_n - mean * mean, 0.0)    # biased var, >= 0
    scale = g_ref[...] * jax.lax.rsqrt(var + eps)
    shift = bt_ref[...] - mean * scale
    y = raw_ref[...].astype(jnp.float32) * scale + shift
    o_ref[...] = jnp.maximum(y, 0.0).astype(o_ref.dtype)


# ----------------------------------------------------------------------------
# Core (NHWC in, phase-separated out) and user-facing wrappers
# ----------------------------------------------------------------------------
def _up_conv_core(x_nhwc, params, *, eps, band_rows, interm_dtype, out_dtype):
    B, H, W, cin = x_nhwc.shape
    w = params["w"].astype(jnp.float32)                      # (Cout, Cin, 3, 3) OIHW
    cout = w.shape[0]

    vmem_cap = _vmem_capacity_bytes()

    # Lane-dense channel tiling; pad Cout up to a 128 multiple only when it is large
    # and misaligned (avoids masked stores / underfilled MXU N without wasting small
    # models).  Padded channels carry zero weights / gamma / beta and are sliced off.
    cout_p = ((cout + 127) // 128) * 128 if (cout > 128 and cout % 128) else cout
    co_t = _pick_co_tile(cout_p, vmem_cap)
    n_co = cout_p // co_t

    ib = jnp.dtype(interm_dtype).itemsize
    ob = jnp.dtype(out_dtype).itemsize
    bh = _pick_band_rows(H, W, cin, co_t, ib, ob, vmem_cap, band_rows)
    nb = H // bh
    vlimit = int(min(0.9 * vmem_cap,
                     max(32 * 2**20,
                         3 * _band_footprint_bytes(bh, W, cin, co_t, ib, ob))))

    # Zero halo at ORIGINAL resolution (the x2-upsampled slab never exists in HBM).
    xq = jnp.pad(x_nhwc, ((0, 0), (1, 1), (1, 1), (0, 0))).astype(jnp.bfloat16)

    # Subpixel-phase weights: output pixel (2i+a, 2j+b) is a 2x2 conv over the halo'd
    # original input; R[phase, tap, k3] sums the 3x3 taps aliasing onto one source
    # row/column under nearest-x2 upsampling.
    R = jnp.array([[[1., 0., 0.], [0., 1., 1.]],
                   [[1., 1., 0.], [0., 0., 1.]]], jnp.float32)
    w4 = jnp.einsum("arh,bsv,oihv->abrsio", R, R, w).reshape(4, 4 * cin, cout)

    gamma = params["gamma"].astype(jnp.float32).reshape(cout)
    beta = params["beta"].astype(jnp.float32).reshape(cout)
    # NOTE: the conv bias params["b"] is intentionally NOT applied: a per-channel
    # constant is cancelled exactly by InstanceNorm's mean subtraction.
    if cout_p != cout:
        w4 = jnp.pad(w4, ((0, 0), (0, 0), (0, cout_p - cout)))
        gamma = jnp.pad(gamma, (0, cout_p - cout))
        beta = jnp.pad(beta, (0, cout_p - cout))
    w4 = w4.astype(jnp.bfloat16)
    gamma = gamma.reshape(1, cout_p)
    beta = beta.reshape(1, cout_p)

    # B and Cout-tile axes are parallel (feeds v7x's two TensorCores when
    # B * n_co >= 2); the band axis carries the stats accumulation -> arbitrary.
    grid = (B, n_co, nb)

    raw, stats = pl.pallas_call(
        _subpixel_conv_stats_kernel,
        out_shape=(jax.ShapeDtypeStruct((B, 4, H, W, cout_p), interm_dtype),
                   jax.ShapeDtypeStruct((B, 2, cout_p), jnp.float32)),
        grid=grid,
        in_specs=[
            pl.BlockSpec((1, bh, W + 2, cin), lambda b, j, k: (b, k, 0, 0)),
            pl.BlockSpec((1, 1, W + 2, cin), lambda b, j, k: (b, (k + 1) * bh, 0, 0)),
            pl.BlockSpec((1, 1, W + 2, cin), lambda b, j, k: (b, (k + 1) * bh + 1, 0, 0)),
            pl.BlockSpec((4, 4 * cin, co_t), lambda b, j, k: (0, 0, j)),
        ],
        out_specs=(
            pl.BlockSpec((1, 4, bh, W, co_t), lambda b, j, k: (b, 0, k, 0, j)),
            pl.BlockSpec((1, 2, co_t), lambda b, j, k: (b, 0, j)),
        ),
        compiler_params=pltpu.CompilerParams(
            dimension_semantics=("parallel", "parallel", "arbitrary"),
            vmem_limit_bytes=vlimit),
    )(xq, xq, xq, w4)

    out_p = pl.pallas_call(
        functools.partial(_instnorm_relu_kernel, eps=eps, inv_n=1.0 / (4.0 * H * W)),
        out_shape=jax.ShapeDtypeStruct((B, 4, H, W, cout_p), out_dtype),
        grid=grid,
        in_specs=[
            pl.BlockSpec((1, 4, bh, W, co_t), lambda b, j, k: (b, 0, k, 0, j)),
            pl.BlockSpec((1, 2, co_t), lambda b, j, k: (b, 0, j)),
            pl.BlockSpec((1, co_t), lambda b, j, k: (0, j)),
            pl.BlockSpec((1, co_t), lambda b, j, k: (0, j)),
        ],
        out_specs=pl.BlockSpec((1, 4, bh, W, co_t), lambda b, j, k: (b, 0, k, 0, j)),
        compiler_params=pltpu.CompilerParams(
            dimension_semantics=("parallel", "parallel", "parallel"),
            vmem_limit_bytes=vlimit),
    )(raw, stats, gamma, beta)

    if cout_p != cout:
        out_p = out_p[..., :cout]
    return out_p  # (B, 4, H, W, Cout), phase index = 2*a + b


def up_conv_forward(x_nchw, params, *, eps=EPS, band_rows=None,
                    interm_dtype=jnp.float32, out_dtype=jnp.float32):
    """Upsample(x2 nearest) -> Conv3x3(pad=1) -> InstanceNorm2d(affine) -> ReLU (NCHW)."""
    x = jnp.transpose(x_nchw, (0, 2, 3, 1))                  # NHWC
    y = _up_conv_core(x, params, eps=eps, band_rows=band_rows,
                      interm_dtype=interm_dtype, out_dtype=out_dtype)
    B, _, H, W, cout = y.shape
    # Single fused layout pass: subpixel-phase interleave + NHWC->NCHW.
    y = y.reshape(B, 2, 2, H, W, cout)
    return jnp.transpose(y, (0, 5, 3, 1, 4, 2)).reshape(B, cout, 2 * H, 2 * W)


def up_conv_forward_nhwc(x_nhwc, params, *, eps=EPS, band_rows=None,
                         interm_dtype=jnp.float32, out_dtype=jnp.float32):
    """Same module, NHWC in / NHWC out (skips the PyTorch NCHW<->NHWC round trips)."""
    y = _up_conv_core(x_nhwc, params, eps=eps, band_rows=band_rows,
                      interm_dtype=interm_dtype, out_dtype=out_dtype)
    B, _, H, W, cout = y.shape
    y = y.reshape(B, 2, 2, H, W, cout)
    return jnp.transpose(y, (0, 3, 1, 4, 2, 5)).reshape(B, 2 * H, 2 * W, cout)


# ----------------------------------------------------------------------------
# Pure-JAX reference (self-check only) and parameter init
# ----------------------------------------------------------------------------
def up_conv_ref(x_nchw, params, *, eps=EPS):
    x = jnp.transpose(x_nchw, (0, 2, 3, 1))
    u = jnp.repeat(jnp.repeat(x, 2, axis=1), 2, axis=2)
    w_hwio = jnp.transpose(params["w"], (2, 3, 1, 0))
    y = jax.lax.conv_general_dilated(
        u, w_hwio, window_strides=(1, 1), padding=((1, 1), (1, 1)),
        dimension_numbers=("NHWC", "HWIO", "NHWC"),
        precision=jax.lax.Precision.HIGHEST)
    y = y + params["b"].reshape(1, 1, 1, -1)
    mean = jnp.mean(y, axis=(1, 2), keepdims=True)
    var = jnp.mean((y - mean) ** 2, axis=(1, 2), keepdims=True)
    y = (y - mean) * jax.lax.rsqrt(var + eps)
    y = y * params["gamma"].reshape(1, 1, 1, -1) + params["beta"].reshape(1, 1, 1, -1)
    y = jnp.maximum(y, 0.0)
    return jnp.transpose(y, (0, 3, 1, 2))


def init_params(key, ch_in, ch_out):
    ks = jax.random.split(key, 4)
    return dict(
        w=0.1 * jax.random.normal(ks[0], (ch_out, ch_in, 3, 3), jnp.float32),
        b=0.1 * jax.random.normal(ks[1], (ch_out,), jnp.float32),
        gamma=1.0 + 0.1 * jax.random.normal(ks[2], (ch_out,), jnp.float32),
        beta=0.1 * jax.random.normal(ks[3], (ch_out,), jnp.float32),
    )


if __name__ == "__main__":
    key = jax.random.PRNGKey(0)
    kx, kp = jax.random.split(key)
    ch_in, ch_out = 4, 4
    x = jax.random.normal(kx, (2, ch_in, 16, 16), jnp.float32)   # NCHW, like torch
    params = init_params(kp, ch_in, ch_out)

    ref = up_conv_ref(x, params)

    # Forced multi-band run (exercises the banded cross-step stats accumulation).
    out = jax.block_until_ready(
        jax.jit(functools.partial(up_conv_forward, band_rows=4))(x, params))
    assert out.shape == (2, ch_out, 32, 32), out.shape
    err = float(jnp.max(jnp.abs(out - ref)))
    # bf16 MXU operands vs f32 reference -> allow a few e-2 absolute error.
    assert jnp.allclose(out, ref, atol=5e-2, rtol=0.0), err

    # Auto-tiled run (band size / channel tile derived from the VMEM budget).
    out2 = jax.block_until_ready(jax.jit(up_conv_forward)(x, params))
    err2 = float(jnp.max(jnp.abs(out2 - ref)))
    assert jnp.allclose(out2, ref, atol=5e-2, rtol=0.0), err2

    print("KERNEL_OK")
</pallas_src>

<mosaic_0001>
module attributes {stable_mosaic.version = 11 : i64} {
  func.func @_subpixel_conv_stats_kernel(%arg0: i32, %arg1: i32, %arg2: i32, %arg3: memref<1x4x18x4xbf16, #tpu.memory_space<vmem>>, %arg4: memref<1x1x18x4xbf16, #tpu.memory_space<vmem>>, %arg5: memref<1x1x18x4xbf16, #tpu.memory_space<vmem>>, %arg6: memref<4x16x4xbf16, #tpu.memory_space<vmem>>, %arg7: memref<1x4x4x16x4xf32, #tpu.memory_space<vmem>>, %arg8: memref<1x2x4xf32, #tpu.memory_space<vmem>>) attributes {dimension_semantics = [#tpu.dimension_semantics<parallel>, #tpu.dimension_semantics<parallel>, #tpu.dimension_semantics<arbitrary>], iteration_bounds = array<i64: 2, 1, 4>, scalar_prefetch = 0 : i64, scratch_operands = 0 : i64, tpu.core_type = #tpu.core_type<tc>, window_params = [{transform_indices = @transform_0, window_bounds = array<i64: 1, 4, 18, 4>}, {transform_indices = @transform_1, window_bounds = array<i64: 1, 1, 18, 4>}, {transform_indices = @transform_2, window_bounds = array<i64: 1, 1, 18, 4>}, {transform_indices = @transform_3, window_bounds = array<i64: 4, 16, 4>}, {transform_indices = @transform_4, window_bounds = array<i64: 1, 4, 4, 16, 4>}, {transform_indices = @transform_5, window_bounds = array<i64: 1, 2, 4>}]} {
    %c0_i32 = arith.constant 0 : i32
    %0 = arith.cmpi eq, %arg2, %c0_i32 : i32
    %1 = arith.extui %0 : i1 to i32
    %c0_i32_0 = arith.constant 0 : i32
    %2 = arith.cmpi ne, %1, %c0_i32_0 : i32
    scf.if %2 {
      %cst_60 = arith.constant 0.000000e+00 : f32
      %102 = vector.broadcast %cst_60 : f32 to vector<1x2x4xf32>
      %c0_61 = arith.constant 0 : index
      %c0_62 = arith.constant 0 : index
      %c0_63 = arith.constant 0 : index
      %103 = vector.load %arg8[%c0_61, %c0_62, %c0_63] : memref<1x2x4xf32, #tpu.memory_space<vmem>>, vector<1x2x4xf32>
      tpu.vector_store %arg8[%c0_61, %c0_62, %c0_63], %102 {strides = array<i32>} : memref<1x2x4xf32, #tpu.memory_space<vmem>>, vector<1x2x4xf32>,
    } else {
    }
    %c0 = arith.constant 0 : index
    %c0_1 = arith.constant 0 : index
    %c0_2 = arith.constant 0 : index
    %c0_3 = arith.constant 0 : index
    %3 = vector.load %arg3[%c0, %c0_1, %c0_2, %c0_3] : memref<1x4x18x4xbf16, #tpu.memory_space<vmem>>, vector<1x4x18x4xbf16>
    %4 = vector.shape_cast %3 : vector<1x4x18x4xbf16> to vector<4x18x4xbf16>
    %c0_4 = arith.constant 0 : index
    %c0_5 = arith.constant 0 : index
    %c0_6 = arith.constant 0 : index
    %c0_7 = arith.constant 0 : index
    %5 = vector.load %arg4[%c0_4, %c0_5, %c0_6, %c0_7] : memref<1x1x18x4xbf16, #tpu.memory_space<vmem>>, vector<1x1x18x4xbf16>
    %6 = vector.shape_cast %5 : vector<1x1x18x4xbf16> to vector<1x18x4xbf16>
    %c0_8 = arith.constant 0 : index
    %c0_9 = arith.constant 0 : index
    %c0_10 = arith.constant 0 : index
    %c0_11 = arith.constant 0 : index
    %7 = vector.load %arg5[%c0_8, %c0_9, %c0_10, %c0_11] : memref<1x1x18x4xbf16, #tpu.memory_space<vmem>>, vector<1x1x18x4xbf16>
    %8 = vector.shape_cast %7 : vector<1x1x18x4xbf16> to vector<1x18x4xbf16>
    %9 = tpu.concatenate %4, %6, %8 in 0 : vector<4x18x4xbf16>, vector<1x18x4xbf16>, vector<1x18x4xbf16> -> vector<6x18x4xbf16>
    %10 = vector.extract_strided_slice %9 {offsets = [0, 0, 0], sizes = [6, 16, 4], strides = [1, 1, 1]} : vector<6x18x4xbf16> to vector<6x16x4xbf16>
    %11 = vector.extract_strided_slice %9 {offsets = [0, 1, 0], sizes = [6, 16, 4], strides = [1, 1, 1]} : vector<6x18x4xbf16> to vector<6x16x4xbf16>
    %12 = vector.extract_strided_slice %9 {offsets = [0, 2, 0], sizes = [6, 16, 4], strides = [1, 1, 1]} : vector<6x18x4xbf16> to vector<6x16x4xbf16>
    %cst = arith.constant 0.000000e+00 : f32
    %13 = vector.broadcast %cst : f32 to vector<1x4xf32>
    %cst_12 = arith.constant 0.000000e+00 : f32
    %14 = vector.broadcast %cst_12 : f32 to vector<1x4xf32>
    %15 = vector.extract_strided_slice %10 {offsets = [0, 0, 0], sizes = [4, 16, 4], strides = [1, 1, 1]} : vector<6x16x4xbf16> to vector<4x16x4xbf16>
    %16 = vector.extract_strided_slice %11 {offsets = [0, 0, 0], sizes = [4, 16, 4], strides = [1, 1, 1]} : vector<6x16x4xbf16> to vector<4x16x4xbf16>
    %17 = vector.extract_strided_slice %10 {offsets = [1, 0, 0], sizes = [4, 16, 4], strides = [1, 1, 1]} : vector<6x16x4xbf16> to vector<4x16x4xbf16>
    %18 = vector.extract_strided_slice %11 {offsets = [1, 0, 0], sizes = [4, 16, 4], strides = [1, 1, 1]} : vector<6x16x4xbf16> to vector<4x16x4xbf16>
    %19 = tpu.concatenate %15, %16, %17, %18 in 2 : vector<4x16x4xbf16>, vector<4x16x4xbf16>, vector<4x16x4xbf16>, vector<4x16x4xbf16> -> vector<4x16x16xbf16>
    %20 = vector.shape_cast %19 : vector<4x16x16xbf16> to vector<64x16xbf16>
    %c0_13 = arith.constant 0 : index
    %c0_14 = arith.constant 0 : index
    %c0_15 = arith.constant 0 : index
    %21 = vector.load %arg6[%c0_13, %c0_14, %c0_15] : memref<4x16x4xbf16, #tpu.memory_space<vmem>>, vector<1x16x4xbf16>
    %22 = vector.shape_cast %21 : vector<1x16x4xbf16> to vector<16x4xbf16>
    %cst_16 = arith.constant dense<0.000000e+00> : vector<64x4xf32>
    %23 = tpu.matmul %20, %22, %cst_16 {dimension_numbers = #tpu.dot_dimension_numbers<[1], [0], [0], [1], [0, 0, 1, 1], [], []>} : vector<64x16xbf16>, vector<16x4xbf16>, vector<64x4xf32> -> vector<64x4xf32>
    %24 = vector.shape_cast %23 : vector<64x4xf32> to vector<4x16x4xf32>
    %c0_17 = arith.constant 0 : index
    %c0_18 = arith.constant 0 : index
    %c0_19 = arith.constant 0 : index
    %c0_20 = arith.constant 0 : index
    %c0_21 = arith.constant 0 : index
    %25 = vector.load %arg7[%c0_17, %c0_18, %c0_19, %c0_20, %c0_21] : memref<1x4x4x16x4xf32, #tpu.memory_space<vmem>>, vector<1x1x4x16x4xf32>
    %26 = vector.shape_cast %25 : vector<1x1x4x16x4xf32> to vector<4x16x4xf32>
    %27 = vector.shape_cast %24 : vector<4x16x4xf32> to vector<1x1x4x16x4xf32>
    tpu.vector_store %arg7[%c0_17, %c0_18, %c0_19, %c0_20, %c0_21], %27 {strides = array<i32>} : memref<1x4x4x16x4xf32, #tpu.memory_space<vmem>>, vector<1x1x4x16x4xf32>,
    %cst_22 = arith.constant dense<0.000000e+00> : vector<4xf32>
    %28 = vector.multi_reduction <add>, %23, %cst_22 [0] : vector<64x4xf32> to vector<4xf32>
    %29 = vector.shape_cast %28 : vector<4xf32> to vector<1x4xf32>
    %30 = arith.addf %13, %29 : vector<1x4xf32>
    %31 = arith.mulf %23, %23 : vector<64x4xf32>
    %cst_23 = arith.constant dense<0.000000e+00> : vector<4xf32>
    %32 = vector.multi_reduction <add>, %31, %cst_23 [0] : vector<64x4xf32> to vector<4xf32>
    %33 = vector.shape_cast %32 : vector<4xf32> to vector<1x4xf32>
    %34 = arith.addf %14, %33 : vector<1x4xf32>
    %35 = vector.extract_strided_slice %11 {offsets = [0, 0, 0], sizes = [4, 16, 4], strides = [1, 1, 1]} : vector<6x16x4xbf16> to vector<4x16x4xbf16>
    %36 = vector.extract_strided_slice %12 {offsets = [0, 0, 0], sizes = [4, 16, 4], strides = [1, 1, 1]} : vector<6x16x4xbf16> to vector<4x16x4xbf16>
    %37 = vector.extract_strided_slice %11 {offsets = [1, 0, 0], sizes = [4, 16, 4], strides = [1, 1, 1]} : vector<6x16x4xbf16> to vector<4x16x4xbf16>
    %38 = vector.extract_strided_slice %12 {offsets = [1, 0, 0], sizes = [4, 16, 4], strides = [1, 1, 1]} : vector<6x16x4xbf16> to vector<4x16x4xbf16>
    %39 = tpu.concatenate %35, %36, %37, %38 in 2 : vector<4x16x4xbf16>, vector<4x16x4xbf16>, vector<4x16x4xbf16>, vector<4x16x4xbf16> -> vector<4x16x16xbf16>
    %40 = vector.shape_cast %39 : vector<4x16x16xbf16> to vector<64x16xbf16>
    %c1 = arith.constant 1 : index
    %c0_24 = arith.constant 0 : index
    %c0_25 = arith.constant 0 : index
    %41 = vector.load %arg6[%c1, %c0_24, %c0_25] : memref<4x16x4xbf16, #tpu.memory_space<vmem>>, vector<1x16x4xbf16>
    %42 = vector.shape_cast %41 : vector<1x16x4xbf16> to vector<16x4xbf16>
    %cst_26 = arith.constant dense<0.000000e+00> : vector<64x4xf32>
    %43 = tpu.matmul %40, %42, %cst_26 {dimension_numbers = #tpu.dot_dimension_numbers<[1], [0], [0], [1], [0, 0, 1, 1], [], []>} : vector<64x16xbf16>, vector<16x4xbf16>, vector<64x4xf32> -> vector<64x4xf32>
    %44 = vector.shape_cast %43 : vector<64x4xf32> to vector<4x16x4xf32>
    %c0_27 = arith.constant 0 : index
    %c1_28 = arith.constant 1 : index
    %c0_29 = arith.constant 0 : index
    %c0_30 = arith.constant 0 : index
    %c0_31 = arith.constant 0 : index
    %45 = vector.load %arg7[%c0_27, %c1_28, %c0_29, %c0_30, %c0_31] : memref<1x4x4x16x4xf32, #tpu.memory_space<vmem>>, vector<1x1x4x16x4xf32>
    %46 = vector.shape_cast %45 : vector<1x1x4x16x4xf32> to vector<4x16x4xf32>
    %47 = vector.shape_cast %44 : vector<4x16x4xf32> to vector<1x1x4x16x4xf32>
    tpu.vector_store %arg7[%c0_27, %c1_28, %c0_29, %c0_30, %c0_31], %47 {strides = array<i32>} : memref<1x4x4x16x4xf32, #tpu.memory_space<vmem>>, vector<1x1x4x16x4xf32>,
    %cst_32 = arith.constant dense<0.000000e+00> : vector<4xf32>
    %48 = vector.multi_reduction <add>, %43, %cst_32 [0] : vector<64x4xf32> to vector<4xf32>
    %49 = vector.shape_cast %48 : vector<4xf32> to vector<1x4xf32>
    %50 = arith.addf %30, %49 : vector<1x4xf32>
    %51 = arith.mulf %43, %43 : vector<64x4xf32>
    %cst_33 = arith.constant dense<0.000000e+00> : vector<4xf32>
    %52 = vector.multi_reduction <add>, %51, %cst_33 [0] : vector<64x4xf32> to vector<4xf32>
    %53 = vector.shape_cast %52 : vector<4xf32> to vector<1x4xf32>
    %54 = arith.addf %34, %53 : vector<1x4xf32>
    %55 = vector.extract_strided_slice %10 {offsets = [1, 0, 0], sizes = [4, 16, 4], strides = [1, 1, 1]} : vector<6x16x4xbf16> to vector<4x16x4xbf16>
    %56 = vector.extract_strided_slice %11 {offsets = [1, 0, 0], sizes = [4, 16, 4], strides = [1, 1, 1]} : vector<6x16x4xbf16> to vector<4x16x4xbf16>
    %57 = vector.extract_strided_slice %10 {offsets = [2, 0, 0], sizes = [4, 16, 4], strides = [1, 1, 1]} : vector<6x16x4xbf16> to vector<4x16x4xbf16>
    %58 = vector.extract_strided_slice %11 {offsets = [2, 0, 0], sizes = [4, 16, 4], strides = [1, 1, 1]} : vector<6x16x4xbf16> to vector<4x16x4xbf16>
    %59 = tpu.concatenate %55, %56, %57, %58 in 2 : vector<4x16x4xbf16>, vector<4x16x4xbf16>, vector<4x16x4xbf16>, vector<4x16x4xbf16> -> vector<4x16x16xbf16>
    %60 = vector.shape_cast %59 : vector<4x16x16xbf16> to vector<64x16xbf16>
    %c2 = arith.constant 2 : index
    %c0_34 = arith.constant 0 : index
    %c0_35 = arith.constant 0 : index
    %61 = vector.load %arg6[%c2, %c0_34, %c0_35] : memref<4x16x4xbf16, #tpu.memory_space<vmem>>, vector<1x16x4xbf16>
    %62 = vector.shape_cast %61 : vector<1x16x4xbf16> to vector<16x4xbf16>
    %cst_36 = arith.constant dense<0.000000e+00> : vector<64x4xf32>
    %63 = tpu.matmul %60, %62, %cst_36 {dimension_numbers = #tpu.dot_dimension_numbers<[1], [0], [0], [1], [0, 0, 1, 1], [], []>} : vector<64x16xbf16>, vector<16x4xbf16>, vector<64x4xf32> -> vector<64x4xf32>
    %64 = vector.shape_cast %63 : vector<64x4xf32> to vector<4x16x4xf32>
    %c0_37 = arith.constant 0 : index
    %c2_38 = arith.constant 2 : index
    %c0_39 = arith.constant 0 : index
    %c0_40 = arith.constant 0 : index
    %c0_41 = arith.constant 0 : index
    %65 = vector.load %arg7[%c0_37, %c2_38, %c0_39, %c0_40, %c0_41] : memref<1x4x4x16x4xf32, #tpu.memory_space<vmem>>, vector<1x1x4x16x4xf32>
    %66 = vector.shape_cast %65 : vector<1x1x4x16x4xf32> to vector<4x16x4xf32>
    %67 = vector.shape_cast %64 : vector<4x16x4xf32> to vector<1x1x4x16x4xf32>
    tpu.vector_store %arg7[%c0_37, %c2_38, %c0_39, %c0_40, %c0_41], %67 {strides = array<i32>} : memref<1x4x4x16x4xf32, #tpu.memory_space<vmem>>, vector<1x1x4x16x4xf32>,
    %cst_42 = arith.constant dense<0.000000e+00> : vector<4xf32>
    %68 = vector.multi_reduction <add>, %63, %cst_42 [0] : vector<64x4xf32> to vector<4xf32>
    %69 = vector.shape_cast %68 : vector<4xf32> to vector<1x4xf32>
    %70 = arith.addf %50, %69 : vector<1x4xf32>
    %71 = arith.mulf %63, %63 : vector<64x4xf32>
    %cst_43 = arith.constant dense<0.000000e+00> : vector<4xf32>
    %72 = vector.multi_reduction <add>, %71, %cst_43 [0] : vector<64x4xf32> to vector<4xf32>
    %73 = vector.shape_cast %72 : vector<4xf32> to vector<1x4xf32>
    %74 = arith.addf %54, %73 : vector<1x4xf32>
    %75 = vector.extract_strided_slice %11 {offsets = [1, 0, 0], sizes = [4, 16, 4], strides = [1, 1, 1]} : vector<6x16x4xbf16> to vector<4x16x4xbf16>
    %76 = vector.extract_strided_slice %12 {offsets = [1, 0, 0], sizes = [4, 16, 4], strides = [1, 1, 1]} : vector<6x16x4xbf16> to vector<4x16x4xbf16>
    %77 = vector.extract_strided_slice %11 {offsets = [2, 0, 0], sizes = [4, 16, 4], strides = [1, 1, 1]} : vector<6x16x4xbf16> to vector<4x16x4xbf16>
    %78 = vector.extract_strided_slice %12 {offsets = [2, 0, 0], sizes = [4, 16, 4], strides = [1, 1, 1]} : vector<6x16x4xbf16> to vector<4x16x4xbf16>
    %79 = tpu.concatenate %75, %76, %77, %78 in 2 : vector<4x16x4xbf16>, vector<4x16x4xbf16>, vector<4x16x4xbf16>, vector<4x16x4xbf16> -> vector<4x16x16xbf16>
    %80 = vector.shape_cast %79 : vector<4x16x16xbf16> to vector<64x16xbf16>
    %c3 = arith.constant 3 : index
    %c0_44 = arith.constant 0 : index
    %c0_45 = arith.constant 0 : index
    %81 = vector.load %arg6[%c3, %c0_44, %c0_45] : memref<4x16x4xbf16, #tpu.memory_space<vmem>>, vector<1x16x4xbf16>
    %82 = vector.shape_cast %81 : vector<1x16x4xbf16> to vector<16x4xbf16>
    %cst_46 = arith.constant dense<0.000000e+00> : vector<64x4xf32>
    %83 = tpu.matmul %80, %82, %cst_46 {dimension_numbers = #tpu.dot_dimension_numbers<[1], [0], [0], [1], [0, 0, 1, 1], [], []>} : vector<64x16xbf16>, vector<16x4xbf16>, vector<64x4xf32> -> vector<64x4xf32>
    %84 = vector.shape_cast %83 : vector<64x4xf32> to vector<4x16x4xf32>
    %c0_47 = arith.constant 0 : index
    %c3_48 = arith.constant 3 : index
    %c0_49 = arith.constant 0 : index
    %c0_50 = arith.constant 0 : index
    %c0_51 = arith.constant 0 : index
    %85 = vector.load %arg7[%c0_47, %c3_48, %c0_49, %c0_50, %c0_51] : memref<1x4x4x16x4xf32, #tpu.memory_space<vmem>>, vector<1x1x4x16x4xf32>
    %86 = vector.shape_cast %85 : vector<1x1x4x16x4xf32> to vector<4x16x4xf32>
    %87 = vector.shape_cast %84 : vector<4x16x4xf32> to vector<1x1x4x16x4xf32>
    tpu.vector_store %arg7[%c0_47, %c3_48, %c0_49, %c0_50, %c0_51], %87 {strides = array<i32>} : memref<1x4x4x16x4xf32, #tpu.memory_space<vmem>>, vector<1x1x4x16x4xf32>,
    %cst_52 = arith.constant dense<0.000000e+00> : vector<4xf32>
    %88 = vector.multi_reduction <add>, %83, %cst_52 [0] : vector<64x4xf32> to vector<4xf32>
    %89 = vector.shape_cast %88 : vector<4xf32> to vector<1x4xf32>
    %90 = arith.addf %70, %89 : vector<1x4xf32>
    %91 = arith.mulf %83, %83 : vector<64x4xf32>
    %cst_53 = arith.constant dense<0.000000e+00> : vector<4xf32>
    %92 = vector.multi_reduction <add>, %91, %cst_53 [0] : vector<64x4xf32> to vector<4xf32>
    %93 = vector.shape_cast %92 : vector<4xf32> to vector<1x4xf32>
    %94 = arith.addf %74, %93 : vector<1x4xf32>
    %c0_54 = arith.constant 0 : index
    %c0_55 = arith.constant 0 : index
    %c0_56 = arith.constant 0 : index
    %95 = vector.load %arg8[%c0_54, %c0_55, %c0_56] : memref<1x2x4xf32, #tpu.memory_space<vmem>>, vector<1x2x4xf32>
    %96 = vector.shape_cast %95 : vector<1x2x4xf32> to vector<2x4xf32>
    %97 = tpu.concatenate %90, %94 in 0 : vector<1x4xf32>, vector<1x4xf32> -> vector<2x4xf32>
    %98 = arith.addf %96, %97 : vector<2x4xf32>
    %c0_57 = arith.constant 0 : index
    %c0_58 = arith.constant 0 : index
    %c0_59 = arith.constant 0 : index
    %99 = vector.load %arg8[%c0_57, %c0_58, %c0_59] : memref<1x2x4xf32, #tpu.memory_space<vmem>>, vector<1x2x4xf32>
    %100 = vector.shape_cast %99 : vector<1x2x4xf32> to vector<2x4xf32>
    %101 = vector.shape_cast %98 : vector<2x4xf32> to vector<1x2x4xf32>
    tpu.vector_store %arg8[%c0_57, %c0_58, %c0_59], %101 {strides = array<i32>} : memref<1x2x4xf32, #tpu.memory_space<vmem>>, vector<1x2x4xf32>,
    return
  }
  func.func @transform_0(%arg0: i32, %arg1: i32, %arg2: i32) -> (i32, i32, i32, i32) {
    %c0_i32 = arith.constant 0 : i32
    %c0_i32_0 = arith.constant 0 : i32
    %c0_i32_1 = arith.constant 0 : i32
    return %arg0, %arg2, %c0_i32, %c0_i32_0 : i32, i32, i32, i32
  }
  func.func @transform_1(%arg0: i32, %arg1: i32, %arg2: i32) -> (i32, i32, i32, i32) {
    %c1_i32 = arith.constant 1 : i32
    %0 = arith.addi %arg2, %c1_i32 : i32
    %c4_i32 = arith.constant 4 : i32
    %1 = arith.muli %0, %c4_i32 : i32
    %c0_i32 = arith.constant 0 : i32
    %c0_i32_0 = arith.constant 0 : i32
    %c0_i32_1 = arith.constant 0 : i32
    return %arg0, %1, %c0_i32, %c0_i32_0 : i32, i32, i32, i32
  }
  func.func @transform_2(%arg0: i32, %arg1: i32, %arg2: i32) -> (i32, i32, i32, i32) {
    %c1_i32 = arith.constant 1 : i32
    %0 = arith.addi %arg2, %c1_i32 : i32
    %c4_i32 = arith.constant 4 : i32
    %1 = arith.muli %0, %c4_i32 : i32
    %c1_i32_0 = arith.constant 1 : i32
    %2 = arith.addi %1, %c1_i32_0 : i32
    %c0_i32 = arith.constant 0 : i32
    %c0_i32_1 = arith.constant 0 : i32
    %c0_i32_2 = arith.constant 0 : i32
    return %arg0, %2, %c0_i32, %c0_i32_1 : i32, i32, i32, i32
  }
  func.func @transform_3(%arg0: i32, %arg1: i32, %arg2: i32) -> (i32, i32, i32) {
    %c0_i32 = arith.constant 0 : i32
    %c0_i32_0 = arith.constant 0 : i32
    %c0_i32_1 = arith.constant 0 : i32
    return %c0_i32, %c0_i32_0, %arg1 : i32, i32, i32
  }
  func.func @transform_4(%arg0: i32, %arg1: i32, %arg2: i32) -> (i32, i32, i32, i32, i32) {
    %c0_i32 = arith.constant 0 : i32
    %c0_i32_0 = arith.constant 0 : i32
    %c0_i32_1 = arith.constant 0 : i32
    return %arg0, %c0_i32, %arg2, %c0_i32_0, %arg1 : i32, i32, i32, i32, i32
  }
  func.func @transform_5(%arg0: i32, %arg1: i32, %arg2: i32) -> (i32, i32, i32) {
    %c0_i32 = arith.constant 0 : i32
    %c0_i32_0 = arith.constant 0 : i32
    return %arg0, %c0_i32, %arg1 : i32, i32, i32
  }
}

module attributes {stable_mosaic.version = 11 : i64} {
  func.func @_instnorm_relu_kernel(%arg0: i32, %arg1: i32, %arg2: i32, %arg3: memref<1x4x4x16x4xf32, #tpu.memory_space<vmem>>, %arg4: memref<1x2x4xf32, #tpu.memory_space<vmem>>, %arg5: memref<1x4xf32, #tpu.memory_space<vmem>>, %arg6: memref<1x4xf32, #tpu.memory_space<vmem>>, %arg7: memref<1x4x4x16x4xf32, #tpu.memory_space<vmem>>) attributes {dimension_semantics = [#tpu.dimension_semantics<parallel>, #tpu.dimension_semantics<parallel>, #tpu.dimension_semantics<parallel>], iteration_bounds = array<i64: 2, 1, 4>, scalar_prefetch = 0 : i64, scratch_operands = 0 : i64, tpu.core_type = #tpu.core_type<tc>, window_params = [{transform_indices = @transform_0, window_bounds = array<i64: 1, 4, 4, 16, 4>}, {transform_indices = @transform_1, window_bounds = array<i64: 1, 2, 4>}, {transform_indices = @transform_2, window_bounds = array<i64: 1, 4>}, {transform_indices = @transform_3, window_bounds = array<i64: 1, 4>}, {transform_indices = @transform_4, window_bounds = array<i64: 1, 4, 4, 16, 4>}]} {
    %c0 = arith.constant 0 : index
    %c0_0 = arith.constant 0 : index
    %c0_1 = arith.constant 0 : index
    %0 = vector.load %arg4[%c0, %c0_0, %c0_1] : memref<1x2x4xf32, #tpu.memory_space<vmem>>, vector<1x2x4xf32>
    %1 = vector.shape_cast %0 : vector<1x2x4xf32> to vector<2x4xf32>
    %2 = vector.extract_strided_slice %1 {offsets = [0, 0], sizes = [1, 4], strides = [1, 1]} : vector<2x4xf32> to vector<1x4xf32>
    %cst = arith.constant 9.765625E-4 : f32
    %3 = vector.broadcast %cst : f32 to vector<1x4xf32>
    %4 = arith.mulf %2, %3 : vector<1x4xf32>
    %5 = vector.extract_strided_slice %1 {offsets = [1, 0], sizes = [1, 4], strides = [1, 1]} : vector<2x4xf32> to vector<1x4xf32>
    %cst_2 = arith.constant 9.765625E-4 : f32
    %6 = vector.broadcast %cst_2 : f32 to vector<1x4xf32>
    %7 = arith.mulf %5, %6 : vector<1x4xf32>
    %8 = arith.mulf %4, %4 : vector<1x4xf32>
    %9 = arith.subf %7, %8 : vector<1x4xf32>
    %cst_3 = arith.constant 0.000000e+00 : f32
    %10 = vector.broadcast %cst_3 : f32 to vector<1x4xf32>
    %11 = arith.maximumf %9, %10 : vector<1x4xf32>
    %c0_4 = arith.constant 0 : index
    %c0_5 = arith.constant 0 : index
    %12 = vector.load %arg5[%c0_4, %c0_5] : memref<1x4xf32, #tpu.memory_space<vmem>>, vector<1x4xf32>
    %cst_6 = arith.constant 9.99999974E-6 : f32
    %13 = vector.broadcast %cst_6 : f32 to vector<1x4xf32>
    %14 = arith.addf %11, %13 : vector<1x4xf32>
    %15 = math.rsqrt %14 : vector<1x4xf32>
    %16 = arith.mulf %12, %15 : vector<1x4xf32>
    %c0_7 = arith.constant 0 : index
    %c0_8 = arith.constant 0 : index
    %17 = vector.load %arg6[%c0_7, %c0_8] : memref<1x4xf32, #tpu.memory_space<vmem>>, vector<1x4xf32>
    %18 = arith.mulf %4, %16 : vector<1x4xf32>
    %19 = arith.subf %17, %18 : vector<1x4xf32>
    %c0_9 = arith.constant 0 : index
    %c0_10 = arith.constant 0 : index
    %c0_11 = arith.constant 0 : index
    %c0_12 = arith.constant 0 : index
    %c0_13 = arith.constant 0 : index
    %20 = vector.load %arg3[%c0_9, %c0_10, %c0_11, %c0_12, %c0_13] : memref<1x4x4x16x4xf32, #tpu.memory_space<vmem>>, vector<1x4x4x16x4xf32>
    %21 = vector.shape_cast %16 : vector<1x4xf32> to vector<1x1x1x1x4xf32>
    %22 = vector.broadcast %21 : vector<1x1x1x1x4xf32> to vector<1x4x4x16x4xf32>
    %23 = arith.mulf %20, %22 : vector<1x4x4x16x4xf32>
    %24 = vector.shape_cast %19 : vector<1x4xf32> to vector<1x1x1x1x4xf32>
    %25 = vector.broadcast %24 : vector<1x1x1x1x4xf32> to vector<1x4x4x16x4xf32>
    %26 = arith.addf %23, %25 : vector<1x4x4x16x4xf32>
    %cst_14 = arith.constant 0.000000e+00 : f32
    %27 = vector.broadcast %cst_14 : f32 to vector<1x4x4x16x4xf32>
    %28 = arith.maximumf %26, %27 : vector<1x4x4x16x4xf32>
    %c0_15 = arith.constant 0 : index
    %c0_16 = arith.constant 0 : index
    %c0_17 = arith.constant 0 : index
    %c0_18 = arith.constant 0 : index
    %c0_19 = arith.constant 0 : index
    %29 = vector.load %arg7[%c0_15, %c0_16, %c0_17, %c0_18, %c0_19] : memref<1x4x4x16x4xf32, #tpu.memory_space<vmem>>, vector<1x4x4x16x4xf32>
    tpu.vector_store %arg7[%c0_15, %c0_16, %c0_17, %c0_18, %c0_19], %28 {strides = array<i32>} : memref<1x4x4x16x4xf32, #tpu.memory_space<vmem>>, vector<1x4x4x16x4xf32>,
    return
  }
  func.func @transform_0(%arg0: i32, %arg1: i32, %arg2: i32) -> (i32, i32, i32, i32, i32) {
    %c0_i32 = arith.constant 0 : i32
    %c0_i32_0 = arith.constant 0 : i32
    %c0_i32_1 = arith.constant 0 : i32
    return %arg0, %c0_i32, %arg2, %c0_i32_0, %arg1 : i32, i32, i32, i32, i32
  }
  func.func @transform_1(%arg0: i32, %arg1: i32, %arg2: i32) -> (i32, i32, i32) {
    %c0_i32 = arith.constant 0 : i32
    %c0_i32_0 = arith.constant 0 : i32
    return %arg0, %c0_i32, %arg1 : i32, i32, i32
  }
  func.func @transform_2(%arg0: i32, %arg1: i32, %arg2: i32) -> (i32, i32) {
    %c0_i32 = arith.constant 0 : i32
    %c0_i32_0 = arith.constant 0 : i32
    return %c0_i32, %arg1 : i32, i32
  }
  func.func @transform_3(%arg0: i32, %arg1: i32, %arg2: i32) -> (i32, i32) {
    %c0_i32 = arith.constant 0 : i32
    %c0_i32_0 = arith.constant 0 : i32
    return %c0_i32, %arg1 : i32, i32
  }
  func.func @transform_4(%arg0: i32, %arg1: i32, %arg2: i32) -> (i32, i32, i32, i32, i32) {
    %c0_i32 = arith.constant 0 : i32
    %c0_i32_0 = arith.constant 0 : i32
    %c0_i32_1 = arith.constant 0 : i32
    return %arg0, %c0_i32, %arg2, %c0_i32_0, %arg1 : i32, i32, i32, i32, i32
  }
}

</mosaic_0001>

<llo_original>
// kernel: up_conv_forward.3
$region0: #{up_conv_forward.3}
  #allocation0 [shape = 'u32[]', space=smem, size = 0x4, offset = 0x4, fixed_abs, tag = 'smem constant byte address 0x4 - core index']
  #allocation1 [shape = 'u32[72,128]{1,0:T(1,128)}', space=vmem, size = 0x9000, scoped, tag = 'internal scratch']
  %s0 = inlined_call_operand.vmem [shape: f32[2,4,16,16,4], index: 0, kind: input, shape index: {}]
  %s1 = inlined_call_operand.vmem [shape: f32[2,2,4], index: 1, kind: input, shape index: {}]
  %s2 = inlined_call_operand.vmem [shape: f32[1,4], index: 2, kind: input, shape index: {}]
  %s3 = inlined_call_operand.vmem [shape: f32[1,4], index: 3, kind: input, shape index: {}]
  %s4 = inlined_call_operand.vmem [shape: f32[2,4,16,16,4], index: 4, kind: output, shape index: {}]
  %s5 = sld [smem:[#allocation0]]
  $region121: #{up_conv_forward.3} parent=0
    _
  %s7 = ssub.s32 1, %s5
  %s8 = scalar_select 0, %s7, %s5
  $region1: #{up_conv_forward.3} parent=0
    #allocation2 [shape = 'u8[262144]{0}', space=vmem, size = 0x40000, scoped, tag = 'input window, operand 0']
    #allocation3 [shape = 'u8[262144]{0}', space=vmem, size = 0x40000, scoped, tag = 'output window, operand 0']
    loop: start=0, step=1, limit=10
    $region2: #{up_conv_forward.3} parent=1 // loop_pre_header
      _
    $region3: #{up_conv_forward.3} parent=1 // loop_header
      %s10 = sphi 0, %s14
      %p11 = scmp.ge.s32.totalorder %s10, 10
      %s17 = sphi 0, %s36
      %s18 = sphi 0, %s32
      %s19 = sphi 0, %s28
      %s20 = sphi 0, %s17
      %s21 = sphi 0, %s18
      %s22 = sphi 0, %s19
      %s23 = sphi 0, %s20
      %s24 = sphi 0, %s21
      %s25 = sphi 0, %s22
      %s43 = sphi 0, %s45
      %s46 = sphi 0, %s43
      %s47 = sphi 0, %s46
      %s63 = sphi 0, %s47
      %s71 = sphi 0, %s73
      %s74 = sphi 0, %s71
      %s75 = sphi 0, %s74
      %s91 = sphi 0, %s75
      %s97 = sphi 0, %s99
      %s100 = sphi 0, %s97
      %s101 = sphi 0, %s100
      %s117 = sphi 0, %s101
      %s123 = sphi 0, %s125
      %s126 = sphi 0, %s123
      %s127 = sphi 0, %s126
      %s143 = sphi 0, %s127
      %s153 = sphi 0, %s155
      %s156 = sphi 0, %s153
      %s157 = sphi 0, %s156
      %s173 = sphi 0, %s157
    $region4: #{up_conv_forward.3} parent=1 // loop_header_branch
      %13 = sbr.rel (%p11) target = $region8
    $region5: #{up_conv_forward.3} parent=1 // loop_body
      %s15 = ssub.s32 %s10, 1
      %s16 = ssub.s32 %s10, 2
      %s26 = sadd.s32 1, %s19
      %p27 = scmp.ge.s32.totalorder %s26, 4
      %s28 = scalar_select %p27, 0, %s26
      %s29 = sadd.s32 1, %s18
      %s30 = scalar_select %p27, %s29, %s18
      %p31 = scmp.ge.s32.totalorder %s30, 1
      %s32 = scalar_select %p31, 0, %s30
      %s33 = sadd.s32 1, %s17
      %s34 = scalar_select %p31, %s33, %s17
      %p35 = scmp.ge.s32.totalorder %s34, 2
      %s36 = scalar_select %p35, 0, %s34
      %s37 = ssub.s32 %s17, %s36
      %s38 = ssub.s32 %s19, %s28
      %s39 = sor.u32 %s37, %s38
      %s40 = ssub.s32 %s18, %s32
      %s41 = sor.u32 %s39, %s40
      %p42 = scmp.eq.s32.totalorder %s41, 0
      %s44 = sadd.s32 %s43, 1
      %s45 = scalar_select %p42, %s43, %s44
      %p48 = pneg %p42
      %p49 = scmp.eq.s32.totalorder %s10, 7
      %p50 = por %p48, %p49
      %p51 = scmp.ne.s32.totalorder %s43, %s46
      %p52 = scmp.eq.s32.totalorder %s10, 0
      %p53 = por %p51, %p52
      %p54 = scmp.ne.s32.totalorder %s43, %s46
      %p55 = scmp.eq.s32.totalorder %s15, 7
      %p56 = por %p54, %p55
      %p57 = scmp.ne.s32.totalorder %s46, %s47
      %p58 = scmp.eq.s32.totalorder %s15, 0
      %p59 = por %p57, %p58
      %p60 = scmp.ne.s32.totalorder %s46, %s47
      %p61 = scmp.eq.s32.totalorder %s16, 7
      %p62 = por %p60, %p61
      %p64 = scmp.ne.s32.totalorder %s47, %s63
      %p65 = scmp.eq.s32.totalorder %s16, 0
      %p66 = por %p64, %p65
      %s67 = ssub.s32 %s17, %s36
      %s68 = ssub.s32 %s18, %s32
      %s69 = sor.u32 %s67, %s68
      %p70 = scmp.eq.s32.totalorder %s69, 0
      %s72 = sadd.s32 %s71, 1
      %s73 = scalar_select %p70, %s71, %s72
      %p76 = pneg %p70
      %p77 = scmp.eq.s32.totalorder %s10, 7
      %p78 = por %p76, %p77
      %p79 = scmp.ne.s32.totalorder %s71, %s74
      %p80 = scmp.eq.s32.totalorder %s10, 0
      %p81 = por %p79, %p80
      %p82 = scmp.ne.s32.totalorder %s71, %s74
      %p83 = scmp.eq.s32.totalorder %s15, 7
      %p84 = por %p82, %p83
      %p85 = scmp.ne.s32.totalorder %s74, %s75
      %p86 = scmp.eq.s32.totalorder %s15, 0
      %p87 = por %p85, %p86
      %p88 = scmp.ne.s32.totalorder %s74, %s75
      %p89 = scmp.eq.s32.totalorder %s16, 7
      %p90 = por %p88, %p89
      %p92 = scmp.ne.s32.totalorder %s75, %s91
      %p93 = scmp.eq.s32.totalorder %s16, 0
      %p94 = por %p92, %p93
      %s95 = ssub.s32 %s18, %s32
      %p96 = scmp.eq.s32.totalorder %s95, 0
      %s98 = sadd.s32 %s97, 1
      %s99 = scalar_select %p96, %s97, %s98
      %p102 = pneg %p96
      %p103 = scmp.eq.s32.totalorder %s10, 7
      %p104 = por %p102, %p103
      %p105 = scmp.ne.s32.totalorder %s97, %s100
      %p106 = scmp.eq.s32.totalorder %s10, 0
      %p107 = por %p105, %p106
      %p108 = scmp.ne.s32.totalorder %s97, %s100
      %p109 = scmp.eq.s32.totalorder %s15, 7
      %p110 = por %p108, %p109
      %p111 = scmp.ne.s32.totalorder %s100, %s101
      %p112 = scmp.eq.s32.totalorder %s15, 0
      %p113 = por %p111, %p112
      %p114 = scmp.ne.s32.totalorder %s100, %s101
      %p115 = scmp.eq.s32.totalorder %s16, 7
      %p116 = por %p114, %p115
      %p118 = scmp.ne.s32.totalorder %s101, %s117
      %p119 = scmp.eq.s32.totalorder %s16, 0
      %p120 = por %p118, %p119
      %s121 = ssub.s32 %s18, %s32
      %p122 = scmp.eq.s32.totalorder %s121, 0
      %s124 = sadd.s32 %s123, 1
      %s125 = scalar_select %p122, %s123, %s124
      %p128 = pneg %p122
      %p129 = scmp.eq.s32.totalorder %s10, 7
      %p130 = por %p128, %p129
      %p131 = scmp.ne.s32.totalorder %s123, %s126
      %p132 = scmp.eq.s32.totalorder %s10, 0
      %p133 = por %p131, %p132
      %p134 = scmp.ne.s32.totalorder %s123, %s126
      %p135 = scmp.eq.s32.totalorder %s15, 7
      %p136 = por %p134, %p135
      %p137 = scmp.ne.s32.totalorder %s126, %s127
      %p138 = scmp.eq.s32.totalorder %s15, 0
      %p139 = por %p137, %p138
      %p140 = scmp.ne.s32.totalorder %s126, %s127
      %p141 = scmp.eq.s32.totalorder %s16, 7
      %p142 = por %p140, %p141
      %p144 = scmp.ne.s32.totalorder %s127, %s143
      %p145 = scmp.eq.s32.totalorder %s16, 0
      %p146 = por %p144, %p145
      %s147 = ssub.s32 %s17, %s36
      %s148 = ssub.s32 %s19, %s28
      %s149 = sor.u32 %s147, %s148
      %s150 = ssub.s32 %s18, %s32
      %s151 = sor.u32 %s149, %s150
      %p152 = scmp.eq.s32.totalorder %s151, 0
      %s154 = sadd.s32 %s153, 1
      %s155 = scalar_select %p152, %s153, %s154
      %p158 = pneg %p152
      %p159 = scmp.eq.s32.totalorder %s10, 7
      %p160 = por %p158, %p159
      %p161 = scmp.ne.s32.totalorder %s153, %s156
      %p162 = scmp.eq.s32.totalorder %s10, 0
      %p163 = por %p161, %p162
      %p164 = scmp.ne.s32.totalorder %s153, %s156
      %p165 = scmp.eq.s32.totalorder %s15, 7
      %p166 = por %p164, %p165
      %p167 = scmp.ne.s32.totalorder %s156, %s157
      %p168 = scmp.eq.s32.totalorder %s15, 0
      %p169 = por %p167, %p168
      %p170 = scmp.ne.s32.totalorder %s156, %s157
      %p171 = scmp.eq.s32.totalorder %s16, 7
      %p172 = por %p170, %p171
      %p174 = scmp.ne.s32.totalorder %s157, %s173
      %p175 = scmp.eq.s32.totalorder %s16, 0
      %p176 = por %p174, %p175
      %p177 = scmp.le.s32.totalorder 1, %s10
      %p178 = scmp.lt.s32.totalorder %s10, 9
      %p179 = pnand %p177, %p178
      %p180 = pneg %p179
      // Predicated region
      $region9: #{up_conv_forward.3} parent=5 // pred_check
        _
      $region10: #{up_conv_forward.3} parent=5 // pred_check_branch
        %182 = sbr.rel (%p179) target = $region12
      $region11: #{up_conv_forward.3} parent=5 // pred_region
        %s183 = ssub.s32 %s10, 1
        // Predicated region
        $region13: #{up_conv_forward.3} parent=11 // pred_check
          %p184 = pneg %p113
        $region14: #{up_conv_forward.3} parent=11 // pred_check_branch
          %186 = sbr.rel (%p184) target = $region16
        $region15: #{up_conv_forward.3} parent=11 // pred_region
          %p187 = scmp.lt.s32.totalorder %s21, 0
          %s188 = scalar_select %p187, %s21, 0
          %s189 = scalar_lea.vmem %s2, %s188
        $region16: #{up_conv_forward.3} parent=11 // pred_fallthru
          _
        // Predicated region
        $region17: #{up_conv_forward.3} parent=11 // pred_check
          %p190 = pneg %p139
        $region18: #{up_conv_forward.3} parent=11 // pred_check_branch
          %192 = sbr.rel (%p190) target = $region20
        $region19: #{up_conv_forward.3} parent=11 // pred_region
          %p193 = scmp.lt.s32.totalorder %s21, 0
          %s194 = scalar_select %p193, %s21, 0
          %s195 = scalar_lea.vmem %s3, %s194
        $region20: #{up_conv_forward.3} parent=11 // pred_fallthru
          _
      $region12: #{up_conv_forward.3} parent=5 // pred_fallthru
        _
      %p196 = scmp.lt.s32.totalorder %s10, 8
      // Predicated region
      $region21: #{up_conv_forward.3} parent=5 // pred_check
        %p197 = pneg %p196
      $region22: #{up_conv_forward.3} parent=5 // pred_check_branch
        %199 = sbr.rel (%p197) target = $region24
      $region23: #{up_conv_forward.3} parent=5 // pred_region
        // Predicated region
        $region25: #{up_conv_forward.3} parent=23 // pred_check
          %p200 = pneg %p53
        $region26: #{up_conv_forward.3} parent=23 // pred_check_branch
          %202 = sbr.rel (%p200) target = $region28
        $region27: #{up_conv_forward.3} parent=23 // pred_region
          %s203 = sand.u32 %s43, 1
          %s204 = sand.u32 %s43, 1
          %s205 = smul.addr %s204, 256
          %s206 = scalar_lea.vmem [#allocation2], %s205
          %s207 = smul.u32 4, %s19
          %s208 = smul.addr %s207, 2
          %s209 = sadd.s32 %s18, %s208
          %s210 = smul.addr %s17, 128
          %s211 = sadd.s32 %s209, %s210
          %s212 = smul.addr %s211, 8
          %s213 = scalar_lea.vmem %s0, %s212
          // Predicated region
          $region29: #{up_conv_forward.3} parent=27 // pred_check
            _
          $region30: #{up_conv_forward.3} parent=27 // pred_check_branch
            %215 = sbr.rel (0) target = $region32
          $region31: #{up_conv_forward.3} parent=27 // pred_region
            // Predicated region
            $region33: #{up_conv_forward.3} parent=31 // pred_check
              _
            $region34: #{up_conv_forward.3} parent=31 // pred_check_branch
              %217 = sbr.rel (0) target = $region36
            $region35: #{up_conv_forward.3} parent=31 // pred_region
              // Predicated region
              $region48: #{up_conv_forward.3} parent=35 // pred_check
                _
              $region49: #{up_conv_forward.3} parent=35 // pred_check_branch
                %295 = sbr.rel (0) target = $region51
              $region50: #{up_conv_forward.3} parent=35 // pred_region
                loop: start=0, step=1, limit=1
                $region52: #{up_conv_forward.3} parent=50 // loop_pre_header
                  _
                $region53: #{up_conv_forward.3} parent=50 // loop_header
                  %s297 = sphi 0, %s301
                  %p298 = scmp.ge.s32.totalorder %s297, 1
                  %s302 = sphi %s213, %s213
                  %s303 = sphi %s206, %s206
                $region54: #{up_conv_forward.3} parent=50 // loop_header_branch
                  %300 = sbr.rel (%p298) target = $region58
                $region55: #{up_conv_forward.3} parent=50 // loop_body
                  %v304 = vld [vmem:[%s302] sm:$0xff]
                  %305 = vst [vmem:[%s303] sm:$0xff] %v304
                  %v306 = vld [vmem:[%s302 + $0x8] sm:$0xff]
                  %307 = vst [vmem:[%s303 + $0x8] sm:$0xff] %v306
                  %v308 = vld [vmem:[%s302 + $0x10] sm:$0xff]
                  %309 = vst [vmem:[%s303 + $0x10] sm:$0xff] %v308
                  %v310 = vld [vmem:[%s302 + $0x18] sm:$0xff]
                  %311 = vst [vmem:[%s303 + $0x18] sm:$0xff] %v310
                  %v312 = vld [vmem:[%s302 + $0x20] sm:$0xff]
                  %313 = vst [vmem:[%s303 + $0x20] sm:$0xff] %v312
                  %v314 = vld [vmem:[%s302 + $0x28] sm:$0xff]
                  %315 = vst [vmem:[%s303 + $0x28] sm:$0xff] %v314
                  %v316 = vld [vmem:[%s302 + $0x30] sm:$0xff]
                  %317 = vst [vmem:[%s303 + $0x30] sm:$0xff] %v316
                  %v318 = vld [vmem:[%s302 + $0x38] sm:$0xff]
                  %319 = vst [vmem:[%s303 + $0x38] sm:$0xff] %v318
                  %v320 = vld [vmem:[%s302 + $0x100] sm:$0xff]
                  %321 = vst [vmem:[%s303 + $0x40] sm:$0xff] %v320
                  %v322 = vld [vmem:[%s302 + $0x108] sm:$0xff]
                  %323 = vst [vmem:[%s303 + $0x48] sm:$0xff] %v322
                  %v324 = vld [vmem:[%s302 + $0x110] sm:$0xff]
                  %325 = vst [vmem:[%s303 + $0x50] sm:$0xff] %v324
                  %v326 = vld [vmem:[%s302 + $0x118] sm:$0xff]
                  %327 = vst [vmem:[%s303 + $0x58] sm:$0xff] %v326
                  %v328 = vld [vmem:[%s302 + $0x120] sm:$0xff]
                  %329 = vst [vmem:[%s303 + $0x60] sm:$0xff] %v328
                  %v330 = vld [vmem:[%s302 + $0x128] sm:$0xff]
                  %331 = vst [vmem:[%s303 + $0x68] sm:$0xff] %v330
                  %v332 = vld [vmem:[%s302 + $0x130] sm:$0xff]
                  %333 = vst [vmem:[%s303 + $0x70] sm:$0xff] %v332
                  %v334 = vld [vmem:[%s302 + $0x138] sm:$0xff]
                  %335 = vst [vmem:[%s303 + $0x78] sm:$0xff] %v334
                  %v336 = vld [vmem:[%s302 + $0x200] sm:$0xff]
                  %337 = vst [vmem:[%s303 + $0x80] sm:$0xff] %v336
                  %v338 = vld [vmem:[%s302 + $0x208] sm:$0xff]
                  %339 = vst [vmem:[%s303 + $0x88] sm:$0xff] %v338
                  %v340 = vld [vmem:[%s302 + $0x210] sm:$0xff]
                  %341 = vst [vmem:[%s303 + $0x90] sm:$0xff] %v340
                  %v342 = vld [vmem:[%s302 + $0x218] sm:$0xff]
                  %343 = vst [vmem:[%s303 + $0x98] sm:$0xff] %v342
                  %v344 = vld [vmem:[%s302 + $0x220] sm:$0xff]
                  %345 = vst [vmem:[%s303 + $0xa0] sm:$0xff] %v344
                  %v346 = vld [vmem:[%s302 + $0x228] sm:$0xff]
                  %347 = vst [vmem:[%s303 + $0xa8] sm:$0xff] %v346
                  %v348 = vld [vmem:[%s302 + $0x230] sm:$0xff]
                  %349 = vst [vmem:[%s303 + $0xb0] sm:$0xff] %v348
                  %v350 = vld [vmem:[%s302 + $0x238] sm:$0xff]
                  %351 = vst [vmem:[%s303 + $0xb8] sm:$0xff] %v350
                  %v352 = vld [vmem:[%s302 + $0x300] sm:$0xff]
                  %353 = vst [vmem:[%s303 + $0xc0] sm:$0xff] %v352
                  %v354 = vld [vmem:[%s302 + $0x308] sm:$0xff]
                  %355 = vst [vmem:[%s303 + $0xc8] sm:$0xff] %v354
                  %v356 = vld [vmem:[%s302 + $0x310] sm:$0xff]
                  %357 = vst [vmem:[%s303 + $0xd0] sm:$0xff] %v356
                  %v358 = vld [vmem:[%s302 + $0x318] sm:$0xff]
                  %359 = vst [vmem:[%s303 + $0xd8] sm:$0xff] %v358
                  %v360 = vld [vmem:[%s302 + $0x320] sm:$0xff]
                  %361 = vst [vmem:[%s303 + $0xe0] sm:$0xff] %v360
                  %v362 = vld [vmem:[%s302 + $0x328] sm:$0xff]
                  %363 = vst [vmem:[%s303 + $0xe8] sm:$0xff] %v362
                  %v364 = vld [vmem:[%s302 + $0x330] sm:$0xff]
                  %365 = vst [vmem:[%s303 + $0xf0] sm:$0xff] %v364
                  %v366 = vld [vmem:[%s302 + $0x338] sm:$0xff]
                  %367 = vst [vmem:[%s303 + $0xf8] sm:$0xff] %v366
                $region56: #{up_conv_forward.3} parent=50 // loop_footer
                  %s301 = sadd.s32 1, %s297
                $region57: #{up_conv_forward.3} parent=50 // loop_footer_branch
                  %296 = sbr.rel target = $region53
                $region58: #{up_conv_forward.3} parent=50 // loop_exit
                  _
              $region51: #{up_conv_forward.3} parent=35 // pred_fallthru
                _
              // Predicated region
              $region59: #{up_conv_forward.3} parent=35 // pred_check
                _
              $region60: #{up_conv_forward.3} parent=35 // pred_check_branch
                %369 = sbr.rel target = $region62
              $region61: #{up_conv_forward.3} parent=35 // pred_region
                _
              $region62: #{up_conv_forward.3} parent=35 // pred_fallthru
                _
            $region36: #{up_conv_forward.3} parent=31 // pred_fallthru
              _
            // Predicated region
            $region37: #{up_conv_forward.3} parent=31 // pred_check
              _
            $region38: #{up_conv_forward.3} parent=31 // pred_check_branch
              %219 = sbr.rel target = $region40
            $region39: #{up_conv_forward.3} parent=31 // pred_region
              %s221 = ssub.s32 256, 1
              loop: start=0, step=1, limit=1
              $region41: #{up_conv_forward.3} parent=39 // loop_pre_header
                _
              $region42: #{up_conv_forward.3} parent=39 // loop_header
                %s223 = sphi 0, %s227
                %p224 = scmp.ge.s32.totalorder %s223, 1
                %s228 = sphi %s213, %s213
                %s229 = sphi %s206, %s206
              $region43: #{up_conv_forward.3} parent=39 // loop_header_branch
                %226 = sbr.rel (%p224) target = $region47
              $region44: #{up_conv_forward.3} parent=39 // loop_body
                %v230 = vld [vmem:[%s228] sm:%s221]
                %231 = vst [vmem:[%s229] sm:%s221] %v230
                %v232 = vld [vmem:[%s228 + $0x8] sm:%s221]
                %233 = vst [vmem:[%s229 + $0x8] sm:%s221] %v232
                %v234 = vld [vmem:[%s228 + $0x10] sm:%s221]
                %235 = vst [vmem:[%s229 + $0x10] sm:%s221] %v234
                %v236 = vld [vmem:[%s228 + $0x18] sm:%s221]
                %237 = vst [vmem:[%s229 + $0x18] sm:%s221] %v236
                %v238 = vld [vmem:[%s228 + $0x20] sm:%s221]
                %239 = vst [vmem:[%s229 + $0x20] sm:%s221] %v238
                %v240 = vld [vmem:[%s228 + $0x28] sm:%s221]
                %241 = vst [vmem:[%s229 + $0x28] sm:%s221] %v240
                %v242 = vld [vmem:[%s228 + $0x30] sm:%s221]
                %243 = vst [vmem:[%s229 + $0x30] sm:%s221] %v242
                %v244 = vld [vmem:[%s228 + $0x38] sm:%s221]
                %245 = vst [vmem:[%s229 + $0x38] sm:%s221] %v244
                %v246 = vld [vmem:[%s228 + $0x100] sm:%s221]
                %247 = vst [vmem:[%s229 + $0x40] sm:%s221] %v246
                %v248 = vld [vmem:[%s228 + $0x108] sm:%s221]
                %249 = vst [vmem:[%s229 + $0x48] sm:%s221] %v248
                %v250 = vld [vmem:[%s228 + $0x110] sm:%s221]
                %251 = vst [vmem:[%s229 + $0x50] sm:%s221] %v250
                %v252 = vld [vmem:[%s228 + $0x118] sm:%s221]
                %253 = vst [vmem:[%s229 + $0x58] sm:%s221] %v252
                %v254 = vld [vmem:[%s228 + $0x120] sm:%s221]
                %255 = vst [vmem:[%s229 + $0x60] sm:%s221] %v254
                %v256 = vld [vmem:[%s228 + $0x128] sm:%s221]
                %257 = vst [vmem:[%s229 + $0x68] sm:%s221] %v256
                %v258 = vld [vmem:[%s228 + $0x130] sm:%s221]
                %259 = vst [vmem:[%s229 + $0x70] sm:%s221] %v258
                %v260 = vld [vmem:[%s228 + $0x138] sm:%s221]
                %261 = vst [vmem:[%s229 + $0x78] sm:%s221] %v260
                %v262 = vld [vmem:[%s228 + $0x200] sm:%s221]
                %263 = vst [vmem:[%s229 + $0x80] sm:%s221] %v262
                %v264 = vld [vmem:[%s228 + $0x208] sm:%s221]
                %265 = vst [vmem:[%s229 + $0x88] sm:%s221] %v264
                %v266 = vld [vmem:[%s228 + $0x210] sm:%s221]
                %267 = vst [vmem:[%s229 + $0x90] sm:%s221] %v266
                %v268 = vld [vmem:[%s228 + $0x218] sm:%s221]
                %269 = vst [vmem:[%s229 + $0x98] sm:%s221] %v268
                %v270 = vld [vmem:[%s228 + $0x220] sm:%s221]
                %271 = vst [vmem:[%s229 + $0xa0] sm:%s221] %v270
                %v272 = vld [vmem:[%s228 + $0x228] sm:%s221]
                %273 = vst [vmem:[%s229 + $0xa8] sm:%s221] %v272
                %v274 = vld [vmem:[%s228 + $0x230] sm:%s221]
                %275 = vst [vmem:[%s229 + $0xb0] sm:%s221] %v274
                %v276 = vld [vmem:[%s228 + $0x238] sm:%s221]
                %277 = vst [vmem:[%s229 + $0xb8] sm:%s221] %v276
                %v278 = vld [vmem:[%s228 + $0x300] sm:%s221]
                %279 = vst [vmem:[%s229 + $0xc0] sm:%s221] %v278
                %v280 = vld [vmem:[%s228 + $0x308] sm:%s221]
                %281 = vst [vmem:[%s229 + $0xc8] sm:%s221] %v280
                %v282 = vld [vmem:[%s228 + $0x310] sm:%s221]
                %283 = vst [vmem:[%s229 + $0xd0] sm:%s221] %v282
                %v284 = vld [vmem:[%s228 + $0x318] sm:%s221]
                %285 = vst [vmem:[%s229 + $0xd8] sm:%s221] %v284
                %v286 = vld [vmem:[%s228 + $0x320] sm:%s221]
                %287 = vst [vmem:[%s229 + $0xe0] sm:%s221] %v286
                %v288 = vld [vmem:[%s228 + $0x328] sm:%s221]
                %289 = vst [vmem:[%s229 + $0xe8] sm:%s221] %v288
                %v290 = vld [vmem:[%s228 + $0x330] sm:%s221]
                %291 = vst [vmem:[%s229 + $0xf0] sm:%s221] %v290
                %v292 = vld [vmem:[%s228 + $0x338] sm:%s221]
                %293 = vst [vmem:[%s229 + $0xf8] sm:%s221] %v292
              $region45: #{up_conv_forward.3} parent=39 // loop_footer
                %s227 = sadd.s32 1, %s223
              $region46: #{up_conv_forward.3} parent=39 // loop_footer_branch
                %222 = sbr.rel target = $region42
              $region47: #{up_conv_forward.3} parent=39 // loop_exit
                _
            $region40: #{up_conv_forward.3} parent=31 // pred_fallthru
              _
          $region32: #{up_conv_forward.3} parent=27 // pred_fallthru
            _
          %370 = vnop
        $region28: #{up_conv_forward.3} parent=23 // pred_fallthru
          _
        // Predicated region
        $region63: #{up_conv_forward.3} parent=23 // pred_check
          %p371 = pneg %p81
        $region64: #{up_conv_forward.3} parent=23 // pred_check_branch
          %373 = sbr.rel (%p371) target = $region66
        $region65: #{up_conv_forward.3} parent=23 // pred_region
          %p374 = scmp.lt.s32.totalorder %s17, 1
          %s375 = scalar_select %p374, %s17, 1
          %p376 = scmp.lt.s32.totalorder %s18, 0
          %s377 = scalar_select %p376, %s18, 0
          %s378 = sadd.s32 %s377, %s375
          %s379 = smul.addr %s378, 2
          %s380 = scalar_lea.vmem %s1, %s379
        $region66: #{up_conv_forward.3} parent=23 // pred_fallthru
          _
      $region24: #{up_conv_forward.3} parent=5 // pred_fallthru
        _
      %p381 = scmp.le.s32.totalorder 1, %s10
      %p382 = scmp.lt.s32.totalorder %s10, 9
      %p383 = pnand %p381, %p382
      %p384 = pneg %p383
      // Predicated region
      $region67: #{up_conv_forward.3} parent=5 // pred_check
        _
      $region68: #{up_conv_forward.3} parent=5 // pred_check_branch
        %386 = sbr.rel (%p383) target = $region70
      $region69: #{up_conv_forward.3} parent=5 // pred_region
        %s387 = ssub.s32 %s10, 1
        %s388 = sand.u32 %s46, 1
        %s389 = sand.u32 %s46, 1
        %s390 = smul.addr %s389, 256
        %s391 = scalar_lea.vmem [#allocation2], %s390
        // Predicated region
        $region71: #{up_conv_forward.3} parent=69 // pred_check
          %p392 = pneg %p59
        $region72: #{up_conv_forward.3} parent=69 // pred_check_branch
          %394 = sbr.rel (%p392) target = $region74
        $region73: #{up_conv_forward.3} parent=69 // pred_region
          _
        $region74: #{up_conv_forward.3} parent=69 // pred_fallthru
          _
        %s395 = sand.u32 %s46, 1
        %s396 = sand.u32 %s46, 1
        %s397 = smul.addr %s396, 256
        %s398 = scalar_lea.vmem [#allocation2], %s397
        %p399 = pneg %p59
        %p400 = pneg %p56
        %p401 = scmp.lt.s32.totalorder %s20, 1
        %s402 = scalar_select %p401, %s20, 1
        %p403 = scmp.lt.s32.totalorder %s21, 0
        %s404 = scalar_select %p403, %s21, 0
        %s405 = sadd.s32 %s404, %s402
        %s406 = smul.addr %s405, 2
        %s407 = scalar_lea.vmem %s1, %s406
        %p408 = pneg %p87
        %p409 = pneg %p84
        %p410 = scmp.lt.s32.totalorder %s21, 0
        %s411 = scalar_select %p410, %s21, 0
        %s412 = scalar_lea.vmem %s2, %s411
        %p413 = pneg %p113
        %p414 = pneg %p110
        %p415 = scmp.lt.s32.totalorder %s21, 0
        %s416 = scalar_select %p415, %s21, 0
        %s417 = scalar_lea.vmem %s3, %s416
        %p418 = pneg %p139
        %p419 = pneg %p136
        %p420 = pneg %p169
        %p421 = pneg %p166
        %s422 = sand.u32 %s156, 1
        %s423 = sand.u32 %s156, 1
        %s424 = smul.addr %s423, 256
        %s425 = scalar_lea.vmem [#allocation3], %s424
        %s426 = smul.u32 4, %s22
        %p427 = scmp.lt.s32.totalorder %s20, 1
        %s428 = scalar_select %p427, %s20, 1
        %p429 = scmp.lt.s32.totalorder %s21, 0
        %s430 = scalar_select %p429, %s21, 0
        %s431 = sadd.s32 %s430, %s428
        %s432 = smul.addr %s431, 2
        %s433 = scalar_lea.vmem %s1, %s432
        %p434 = scmp.lt.s32.totalorder %s21, 0
        %s435 = scalar_select %p434, %s21, 0
        %s436 = scalar_lea.vmem %s2, %s435
        %p437 = scmp.lt.s32.totalorder %s21, 0
        %s438 = scalar_select %p437, %s21, 0
        %s439 = scalar_lea.vmem %s3, %s438
        %s440 = smul.u32 4, %s22
        %v441 = vld [vmem:[%s433] sm:$0x3]
        %v442 = vmul.f32 %v441, 0.0009765625
        %v443 = vmul.f32 %v442, %v442
        %v445 = vrot.slane %v443, 7
        %v447 = vsub.f32 %v442, %v445
        %v448 = vmax.f32 %v447, 0.0
        %v449 = vld [vmem:[%s436] sm:$0x1]
        %v450 = vadd.f32 %v448, 1e-05
        %v451 = vrsqrt.pop %v450
        %v452 = vmul.f32 %v451, %v450
        %v453 = vmul.f32 %v452, %v451
        %v454 = vmul.f32 0.5, %v453
        %v455 = vsub.f32 1.5, %v454
        %v456 = vmul.f32 %v451, %v455
        %vm457 = vweird.f32 %v450
        %vm458 = vweird.f32 %v451
        %vm459 = vmor %vm457, %vm458
        %v460 = vsel %vm459, %v451, %v456
        %462 = vst [vmem:[#allocation1] sm:$0xff] %v460
        %s463 = scalar_lea.vmem [#allocation1], 1
        %v464 = vld [vmem:[%s463] ss:$9 sm:$0xff]
        %v466 = vmul.f32 %v449, %v464
        %v467 = vld [vmem:[%s439] sm:$0x1]
        %v468 = vmul.f32 %v442, %v466
        %v469 = vsub.f32 %v467, %v468
        %v470 = vld [vmem:[%s391] sm:$0xff]
        %v471 = vld [vmem:[%s391 + $0x8] sm:$0xff]
        %v472 = vld [vmem:[%s391 + $0x10] sm:$0xff]
        %v473 = vld [vmem:[%s391 + $0x18] sm:$0xff]
        %v474 = vld [vmem:[%s391 + $0x20] sm:$0xff]
        %v475 = vld [vmem:[%s391 + $0x28] sm:$0xff]
        %v476 = vld [vmem:[%s391 + $0x30] sm:$0xff]
        %v477 = vld [vmem:[%s391 + $0x38] sm:$0xff]
        %v478 = vld [vmem:[%s391 + $0x40] sm:$0xff]
        %v479 = vld [vmem:[%s391 + $0x48] sm:$0xff]
        %v480 = vld [vmem:[%s391 + $0x50] sm:$0xff]
        %v481 = vld [vmem:[%s391 + $0x58] sm:$0xff]
        %v482 = vld [vmem:[%s391 + $0x60] sm:$0xff]
        %v483 = vld [vmem:[%s391 + $0x68] sm:$0xff]
        %v484 = vld [vmem:[%s391 + $0x70] sm:$0xff]
        %v485 = vld [vmem:[%s391 + $0x78] sm:$0xff]
        %v486 = vld [vmem:[%s391 + $0x80] sm:$0xff]
        %v487 = vld [vmem:[%s391 + $0x88] sm:$0xff]
        %v488 = vld [vmem:[%s391 + $0x90] sm:$0xff]
        %v489 = vld [vmem:[%s391 + $0x98] sm:$0xff]
        %v490 = vld [vmem:[%s391 + $0xa0] sm:$0xff]
        %v491 = vld [vmem:[%s391 + $0xa8] sm:$0xff]
        %v492 = vld [vmem:[%s391 + $0xb0] sm:$0xff]
        %v493 = vld [vmem:[%s391 + $0xb8] sm:$0xff]
        %v494 = vld [vmem:[%s391 + $0xc0] sm:$0xff]
        %v495 = vld [vmem:[%s391 + $0xc8] sm:$0xff]
        %v496 = vld [vmem:[%s391 + $0xd0] sm:$0xff]
        %v497 = vld [vmem:[%s391 + $0xd8] sm:$0xff]
        %v498 = vld [vmem:[%s391 + $0xe0] sm:$0xff]
        %v499 = vld [vmem:[%s391 + $0xe8] sm:$0xff]
        %v500 = vld [vmem:[%s391 + $0xf0] sm:$0xff]
        %v501 = vld [vmem:[%s391 + $0xf8] sm:$0xff]
        %v503 = vperm.slane %v466, 0
        %v505 = vmul.f32 %v470, %v503
        %v506 = vmul.f32 %v471, %v503
        %v507 = vmul.f32 %v472, %v503
        %v508 = vmul.f32 %v473, %v503
        %v509 = vmul.f32 %v474, %v503
        %v510 = vmul.f32 %v475, %v503
        %v511 = vmul.f32 %v476, %v503
        %v512 = vmul.f32 %v477, %v503
        %v513 = vmul.f32 %v478, %v503
        %v514 = vmul.f32 %v479, %v503
        %v515 = vmul.f32 %v480, %v503
        %v516 = vmul.f32 %v481, %v503
        %v517 = vmul.f32 %v482, %v503
        %v518 = vmul.f32 %v483, %v503
        %v519 = vmul.f32 %v484, %v503
        %v520 = vmul.f32 %v485, %v503
        %v521 = vmul.f32 %v486, %v503
        %v522 = vmul.f32 %v487, %v503
        %v523 = vmul.f32 %v488, %v503
        %v524 = vmul.f32 %v489, %v503
        %v525 = vmul.f32 %v490, %v503
        %v526 = vmul.f32 %v491, %v503
        %v527 = vmul.f32 %v492, %v503
        %v528 = vmul.f32 %v493, %v503
        %v529 = vmul.f32 %v494, %v503
        %v530 = vmul.f32 %v495, %v503
        %v531 = vmul.f32 %v496, %v503
        %v532 = vmul.f32 %v497, %v503
        %v533 = vmul.f32 %v498, %v503
        %v534 = vmul.f32 %v499, %v503
        %v535 = vmul.f32 %v500, %v503
        %v536 = vmul.f32 %v501, %v503
        %v538 = vperm.slane %v469, 0
        %v540 = vadd.f32 %v505, %v538
        %v541 = vadd.f32 %v506, %v538
        %v542 = vadd.f32 %v507, %v538
        %v543 = vadd.f32 %v508, %v538
        %v544 = vadd.f32 %v509, %v538
        %v545 = vadd.f32 %v510, %v538
        %v546 = vadd.f32 %v511, %v538
        %v547 = vadd.f32 %v512, %v538
        %v548 = vadd.f32 %v513, %v538
        %v549 = vadd.f32 %v514, %v538
        %v550 = vadd.f32 %v515, %v538
        %v551 = vadd.f32 %v516, %v538
        %v552 = vadd.f32 %v517, %v538
        %v553 = vadd.f32 %v518, %v538
        %v554 = vadd.f32 %v519, %v538
        %v555 = vadd.f32 %v520, %v538
        %v556 = vadd.f32 %v521, %v538
        %v557 = vadd.f32 %v522, %v538
        %v558 = vadd.f32 %v523, %v538
        %v559 = vadd.f32 %v524, %v538
        %v560 = vadd.f32 %v525, %v538
        %v561 = vadd.f32 %v526, %v538
        %v562 = vadd.f32 %v527, %v538
        %v563 = vadd.f32 %v528, %v538
        %v564 = vadd.f32 %v529, %v538
        %v565 = vadd.f32 %v530, %v538
        %v566 = vadd.f32 %v531, %v538
        %v567 = vadd.f32 %v532, %v538
        %v568 = vadd.f32 %v533, %v538
        %v569 = vadd.f32 %v534, %v538
        %v570 = vadd.f32 %v535, %v538
        %v571 = vadd.f32 %v536, %v538
        %v572 = vmax.f32 %v540, 0.0
        %v573 = vmax.f32 %v541, 0.0
        %v574 = vmax.f32 %v542, 0.0
        %v575 = vmax.f32 %v543, 0.0
        %v576 = vmax.f32 %v544, 0.0
        %v577 = vmax.f32 %v545, 0.0
        %v578 = vmax.f32 %v546, 0.0
        %v579 = vmax.f32 %v547, 0.0
        %v580 = vmax.f32 %v548, 0.0
        %v581 = vmax.f32 %v549, 0.0
        %v582 = vmax.f32 %v550, 0.0
        %v583 = vmax.f32 %v551, 0.0
        %v584 = vmax.f32 %v552, 0.0
        %v585 = vmax.f32 %v553, 0.0
        %v586 = vmax.f32 %v554, 0.0
        %v587 = vmax.f32 %v555, 0.0
        %v588 = vmax.f32 %v556, 0.0
        %v589 = vmax.f32 %v557, 0.0
        %v590 = vmax.f32 %v558, 0.0
        %v591 = vmax.f32 %v559, 0.0
        %v592 = vmax.f32 %v560, 0.0
        %v593 = vmax.f32 %v561, 0.0
        %v594 = vmax.f32 %v562, 0.0
        %v595 = vmax.f32 %v563, 0.0
        %v596 = vmax.f32 %v564, 0.0
        %v597 = vmax.f32 %v565, 0.0
        %v598 = vmax.f32 %v566, 0.0
        %v599 = vmax.f32 %v567, 0.0
        %v600 = vmax.f32 %v568, 0.0
        %v601 = vmax.f32 %v569, 0.0
        %v602 = vmax.f32 %v570, 0.0
        %v603 = vmax.f32 %v571, 0.0
        %vm604 = vcmask 31744
        %605 = vst.msk [vmem:[%s425] sm:$0xff] %vm604, %v572
        %606 = vst.msk [vmem:[%s425 + $0x8] sm:$0xff] %vm604, %v573
        %607 = vst.msk [vmem:[%s425 + $0x10] sm:$0xff] %vm604, %v574
        %608 = vst.msk [vmem:[%s425 + $0x18] sm:$0xff] %vm604, %v575
        %609 = vst.msk [vmem:[%s425 + $0x20] sm:$0xff] %vm604, %v576
        %610 = vst.msk [vmem:[%s425 + $0x28] sm:$0xff] %vm604, %v577
        %611 = vst.msk [vmem:[%s425 + $0x30] sm:$0xff] %vm604, %v578
        %612 = vst.msk [vmem:[%s425 + $0x38] sm:$0xff] %vm604, %v579
        %613 = vst.msk [vmem:[%s425 + $0x40] sm:$0xff] %vm604, %v580
        %614 = vst.msk [vmem:[%s425 + $0x48] sm:$0xff] %vm604, %v581
        %615 = vst.msk [vmem:[%s425 + $0x50] sm:$0xff] %vm604, %v582
        %616 = vst.msk [vmem:[%s425 + $0x58] sm:$0xff] %vm604, %v583
        %617 = vst.msk [vmem:[%s425 + $0x60] sm:$0xff] %vm604, %v584
        %618 = vst.msk [vmem:[%s425 + $0x68] sm:$0xff] %vm604, %v585
        %619 = vst.msk [vmem:[%s425 + $0x70] sm:$0xff] %vm604, %v586
        %620 = vst.msk [vmem:[%s425 + $0x78] sm:$0xff] %vm604, %v587
        %621 = vst.msk [vmem:[%s425 + $0x80] sm:$0xff] %vm604, %v588
        %622 = vst.msk [vmem:[%s425 + $0x88] sm:$0xff] %vm604, %v589
        %623 = vst.msk [vmem:[%s425 + $0x90] sm:$0xff] %vm604, %v590
        %624 = vst.msk [vmem:[%s425 + $0x98] sm:$0xff] %vm604, %v591
        %625 = vst.msk [vmem:[%s425 + $0xa0] sm:$0xff] %vm604, %v592
        %626 = vst.msk [vmem:[%s425 + $0xa8] sm:$0xff] %vm604, %v593
        %627 = vst.msk [vmem:[%s425 + $0xb0] sm:$0xff] %vm604, %v594
        %628 = vst.msk [vmem:[%s425 + $0xb8] sm:$0xff] %vm604, %v595
        %629 = vst.msk [vmem:[%s425 + $0xc0] sm:$0xff] %vm604, %v596
        %630 = vst.msk [vmem:[%s425 + $0xc8] sm:$0xff] %vm604, %v597
        %631 = vst.msk [vmem:[%s425 + $0xd0] sm:$0xff] %vm604, %v598
        %632 = vst.msk [vmem:[%s425 + $0xd8] sm:$0xff] %vm604, %v599
        %633 = vst.msk [vmem:[%s425 + $0xe0] sm:$0xff] %vm604, %v600
        %634 = vst.msk [vmem:[%s425 + $0xe8] sm:$0xff] %vm604, %v601
        %635 = vst.msk [vmem:[%s425 + $0xf0] sm:$0xff] %vm604, %v602
        %636 = vst.msk [vmem:[%s425 + $0xf8] sm:$0xff] %vm604, %v603
        %s637 = sand.u32 %s156, 1
        %s638 = sand.u32 %s156, 1
        %s639 = smul.addr %s638, 256
        %s640 = scalar_lea.vmem [#allocation3], %s639
        // Predicated region
        $region75: #{up_conv_forward.3} parent=69 // pred_check
          %p641 = pneg %p166
        $region76: #{up_conv_forward.3} parent=69 // pred_check_branch
          %643 = sbr.rel (%p641) target = $region78
        $region77: #{up_conv_forward.3} parent=69 // pred_region
          %s644 = smul.u32 4, %s22
          %s645 = smul.addr %s644, 2
          %s646 = sadd.s32 %s21, %s645
          %s647 = smul.addr %s20, 128
          %s648 = sadd.s32 %s646, %s647
          %s649 = smul.addr %s648, 8
          %s650 = scalar_lea.vmem %s4, %s649
          // Predicated region
          $region79: #{up_conv_forward.3} parent=77 // pred_check
            _
          $region80: #{up_conv_forward.3} parent=77 // pred_check_branch
            %652 = sbr.rel (0) target = $region82
          $region81: #{up_conv_forward.3} parent=77 // pred_region
            // Predicated region
            $region83: #{up_conv_forward.3} parent=81 // pred_check
              _
            $region84: #{up_conv_forward.3} parent=81 // pred_check_branch
              %654 = sbr.rel (0) target = $region86
            $region85: #{up_conv_forward.3} parent=81 // pred_region
              // Predicated region
              $region98: #{up_conv_forward.3} parent=85 // pred_check
                _
              $region99: #{up_conv_forward.3} parent=85 // pred_check_branch
                %732 = sbr.rel (0) target = $region101
              $region100: #{up_conv_forward.3} parent=85 // pred_region
                loop: start=0, step=1, limit=1
                $region102: #{up_conv_forward.3} parent=100 // loop_pre_header
                  _
                $region103: #{up_conv_forward.3} parent=100 // loop_header
                  %s734 = sphi 0, %s738
                  %p735 = scmp.ge.s32.totalorder %s734, 1
                  %s739 = sphi %s640, %s640
                  %s740 = sphi %s650, %s650
                $region104: #{up_conv_forward.3} parent=100 // loop_header_branch
                  %737 = sbr.rel (%p735) target = $region108
                $region105: #{up_conv_forward.3} parent=100 // loop_body
                  %v741 = vld [vmem:[%s739] sm:$0xff]
                  %742 = vst [vmem:[%s740] sm:$0xff] %v741
                  %v743 = vld [vmem:[%s739 + $0x8] sm:$0xff]
                  %744 = vst [vmem:[%s740 + $0x8] sm:$0xff] %v743
                  %v745 = vld [vmem:[%s739 + $0x10] sm:$0xff]
                  %746 = vst [vmem:[%s740 + $0x10] sm:$0xff] %v745
                  %v747 = vld [vmem:[%s739 + $0x18] sm:$0xff]
                  %748 = vst [vmem:[%s740 + $0x18] sm:$0xff] %v747
                  %v749 = vld [vmem:[%s739 + $0x20] sm:$0xff]
                  %750 = vst [vmem:[%s740 + $0x20] sm:$0xff] %v749
                  %v751 = vld [vmem:[%s739 + $0x28] sm:$0xff]
                  %752 = vst [vmem:[%s740 + $0x28] sm:$0xff] %v751
                  %v753 = vld [vmem:[%s739 + $0x30] sm:$0xff]
                  %754 = vst [vmem:[%s740 + $0x30] sm:$0xff] %v753
                  %v755 = vld [vmem:[%s739 + $0x38] sm:$0xff]
                  %756 = vst [vmem:[%s740 + $0x38] sm:$0xff] %v755
                  %v757 = vld [vmem:[%s739 + $0x40] sm:$0xff]
                  %758 = vst [vmem:[%s740 + $0x100] sm:$0xff] %v757
                  %v759 = vld [vmem:[%s739 + $0x48] sm:$0xff]
                  %760 = vst [vmem:[%s740 + $0x108] sm:$0xff] %v759
                  %v761 = vld [vmem:[%s739 + $0x50] sm:$0xff]
                  %762 = vst [vmem:[%s740 + $0x110] sm:$0xff] %v761
                  %v763 = vld [vmem:[%s739 + $0x58] sm:$0xff]
                  %764 = vst [vmem:[%s740 + $0x118] sm:$0xff] %v763
                  %v765 = vld [vmem:[%s739 + $0x60] sm:$0xff]
                  %766 = vst [vmem:[%s740 + $0x120] sm:$0xff] %v765
                  %v767 = vld [vmem:[%s739 + $0x68] sm:$0xff]
                  %768 = vst [vmem:[%s740 + $0x128] sm:$0xff] %v767
                  %v769 = vld [vmem:[%s739 + $0x70] sm:$0xff]
                  %770 = vst [vmem:[%s740 + $0x130] sm:$0xff] %v769
                  %v771 = vld [vmem:[%s739 + $0x78] sm:$0xff]
                  %772 = vst [vmem:[%s740 + $0x138] sm:$0xff] %v771
                  %v773 = vld [vmem:[%s739 + $0x80] sm:$0xff]
                  %774 = vst [vmem:[%s740 + $0x200] sm:$0xff] %v773
                  %v775 = vld [vmem:[%s739 + $0x88] sm:$0xff]
                  %776 = vst [vmem:[%s740 + $0x208] sm:$0xff] %v775
                  %v777 = vld [vmem:[%s739 + $0x90] sm:$0xff]
                  %778 = vst [vmem:[%s740 + $0x210] sm:$0xff] %v777
                  %v779 = vld [vmem:[%s739 + $0x98] sm:$0xff]
                  %780 = vst [vmem:[%s740 + $0x218] sm:$0xff] %v779
                  %v781 = vld [vmem:[%s739 + $0xa0] sm:$0xff]
                  %782 = vst [vmem:[%s740 + $0x220] sm:$0xff] %v781
                  %v783 = vld [vmem:[%s739 + $0xa8] sm:$0xff]
                  %784 = vst [vmem:[%s740 + $0x228] sm:$0xff] %v783
                  %v785 = vld [vmem:[%s739 + $0xb0] sm:$0xff]
                  %786 = vst [vmem:[%s740 + $0x230] sm:$0xff] %v785
                  %v787 = vld [vmem:[%s739 + $0xb8] sm:$0xff]
                  %788 = vst [vmem:[%s740 + $0x238] sm:$0xff] %v787
                  %v789 = vld [vmem:[%s739 + $0xc0] sm:$0xff]
                  %790 = vst [vmem:[%s740 + $0x300] sm:$0xff] %v789
                  %v791 = vld [vmem:[%s739 + $0xc8] sm:$0xff]
                  %792 = vst [vmem:[%s740 + $0x308] sm:$0xff] %v791
                  %v793 = vld [vmem:[%s739 + $0xd0] sm:$0xff]
                  %794 = vst [vmem:[%s740 + $0x310] sm:$0xff] %v793
                  %v795 = vld [vmem:[%s739 + $0xd8] sm:$0xff]
                  %796 = vst [vmem:[%s740 + $0x318] sm:$0xff] %v795
                  %v797 = vld [vmem:[%s739 + $0xe0] sm:$0xff]
                  %798 = vst [vmem:[%s740 + $0x320] sm:$0xff] %v797
                  %v799 = vld [vmem:[%s739 + $0xe8] sm:$0xff]
                  %800 = vst [vmem:[%s740 + $0x328] sm:$0xff] %v799
                  %v801 = vld [vmem:[%s739 + $0xf0] sm:$0xff]
                  %802 = vst [vmem:[%s740 + $0x330] sm:$0xff] %v801
                  %v803 = vld [vmem:[%s739 + $0xf8] sm:$0xff]
                  %804 = vst [vmem:[%s740 + $0x338] sm:$0xff] %v803
                $region106: #{up_conv_forward.3} parent=100 // loop_footer
                  %s738 = sadd.s32 1, %s734
                $region107: #{up_conv_forward.3} parent=100 // loop_footer_branch
                  %733 = sbr.rel target = $region103
                $region108: #{up_conv_forward.3} parent=100 // loop_exit
                  _
              $region101: #{up_conv_forward.3} parent=85 // pred_fallthru
                _
              // Predicated region
              $region109: #{up_conv_forward.3} parent=85 // pred_check
                _
              $region110: #{up_conv_forward.3} parent=85 // pred_check_branch
                %806 = sbr.rel target = $region112
              $region111: #{up_conv_forward.3} parent=85 // pred_region
                _
              $region112: #{up_conv_forward.3} parent=85 // pred_fallthru
                _
            $region86: #{up_conv_forward.3} parent=81 // pred_fallthru
              _
            // Predicated region
            $region87: #{up_conv_forward.3} parent=81 // pred_check
              _
            $region88: #{up_conv_forward.3} parent=81 // pred_check_branch
              %656 = sbr.rel target = $region90
            $region89: #{up_conv_forward.3} parent=81 // pred_region
              %s658 = ssub.s32 256, 1
              loop: start=0, step=1, limit=1
              $region91: #{up_conv_forward.3} parent=89 // loop_pre_header
                _
              $region92: #{up_conv_forward.3} parent=89 // loop_header
                %s660 = sphi 0, %s664
                %p661 = scmp.ge.s32.totalorder %s660, 1
                %s665 = sphi %s640, %s640
                %s666 = sphi %s650, %s650
              $region93: #{up_conv_forward.3} parent=89 // loop_header_branch
                %663 = sbr.rel (%p661) target = $region97
              $region94: #{up_conv_forward.3} parent=89 // loop_body
                %v667 = vld [vmem:[%s665] sm:%s658]
                %668 = vst [vmem:[%s666] sm:%s658] %v667
                %v669 = vld [vmem:[%s665 + $0x8] sm:%s658]
                %670 = vst [vmem:[%s666 + $0x8] sm:%s658] %v669
                %v671 = vld [vmem:[%s665 + $0x10] sm:%s658]
                %672 = vst [vmem:[%s666 + $0x10] sm:%s658] %v671
                %v673 = vld [vmem:[%s665 + $0x18] sm:%s658]
                %674 = vst [vmem:[%s666 + $0x18] sm:%s658] %v673
                %v675 = vld [vmem:[%s665 + $0x20] sm:%s658]
                %676 = vst [vmem:[%s666 + $0x20] sm:%s658] %v675
                %v677 = vld [vmem:[%s665 + $0x28] sm:%s658]
                %678 = vst [vmem:[%s666 + $0x28] sm:%s658] %v677
                %v679 = vld [vmem:[%s665 + $0x30] sm:%s658]
                %680 = vst [vmem:[%s666 + $0x30] sm:%s658] %v679
                %v681 = vld [vmem:[%s665 + $0x38] sm:%s658]
                %682 = vst [vmem:[%s666 + $0x38] sm:%s658] %v681
                %v683 = vld [vmem:[%s665 + $0x40] sm:%s658]
                %684 = vst [vmem:[%s666 + $0x100] sm:%s658] %v683
                %v685 = vld [vmem:[%s665 + $0x48] sm:%s658]
                %686 = vst [vmem:[%s666 + $0x108] sm:%s658] %v685
                %v687 = vld [vmem:[%s665 + $0x50] sm:%s658]
                %688 = vst [vmem:[%s666 + $0x110] sm:%s658] %v687
                %v689 = vld [vmem:[%s665 + $0x58] sm:%s658]
                %690 = vst [vmem:[%s666 + $0x118] sm:%s658] %v689
                %v691 = vld [vmem:[%s665 + $0x60] sm:%s658]
                %692 = vst [vmem:[%s666 + $0x120] sm:%s658] %v691
                %v693 = vld [vmem:[%s665 + $0x68] sm:%s658]
                %694 = vst [vmem:[%s666 + $0x128] sm:%s658] %v693
                %v695 = vld [vmem:[%s665 + $0x70] sm:%s658]
                %696 = vst [vmem:[%s666 + $0x130] sm:%s658] %v695
                %v697 = vld [vmem:[%s665 + $0x78] sm:%s658]
                %698 = vst [vmem:[%s666 + $0x138] sm:%s658] %v697
                %v699 = vld [vmem:[%s665 + $0x80] sm:%s658]
                %700 = vst [vmem:[%s666 + $0x200] sm:%s658] %v699
                %v701 = vld [vmem:[%s665 + $0x88] sm:%s658]
                %702 = vst [vmem:[%s666 + $0x208] sm:%s658] %v701
                %v703 = vld [vmem:[%s665 + $0x90] sm:%s658]
                %704 = vst [vmem:[%s666 + $0x210] sm:%s658] %v703
                %v705 = vld [vmem:[%s665 + $0x98] sm:%s658]
                %706 = vst [vmem:[%s666 + $0x218] sm:%s658] %v705
                %v707 = vld [vmem:[%s665 + $0xa0] sm:%s658]
                %708 = vst [vmem:[%s666 + $0x220] sm:%s658] %v707
                %v709 = vld [vmem:[%s665 + $0xa8] sm:%s658]
                %710 = vst [vmem:[%s666 + $0x228] sm:%s658] %v709
                %v711 = vld [vmem:[%s665 + $0xb0] sm:%s658]
                %712 = vst [vmem:[%s666 + $0x230] sm:%s658] %v711
                %v713 = vld [vmem:[%s665 + $0xb8] sm:%s658]
                %714 = vst [vmem:[%s666 + $0x238] sm:%s658] %v713
                %v715 = vld [vmem:[%s665 + $0xc0] sm:%s658]
                %716 = vst [vmem:[%s666 + $0x300] sm:%s658] %v715
                %v717 = vld [vmem:[%s665 + $0xc8] sm:%s658]
                %718 = vst [vmem:[%s666 + $0x308] sm:%s658] %v717
                %v719 = vld [vmem:[%s665 + $0xd0] sm:%s658]
                %720 = vst [vmem:[%s666 + $0x310] sm:%s658] %v719
                %v721 = vld [vmem:[%s665 + $0xd8] sm:%s658]
                %722 = vst [vmem:[%s666 + $0x318] sm:%s658] %v721
                %v723 = vld [vmem:[%s665 + $0xe0] sm:%s658]
                %724 = vst [vmem:[%s666 + $0x320] sm:%s658] %v723
                %v725 = vld [vmem:[%s665 + $0xe8] sm:%s658]
                %726 = vst [vmem:[%s666 + $0x328] sm:%s658] %v725
                %v727 = vld [vmem:[%s665 + $0xf0] sm:%s658]
                %728 = vst [vmem:[%s666 + $0x330] sm:%s658] %v727
                %v729 = vld [vmem:[%s665 + $0xf8] sm:%s658]
                %730 = vst [vmem:[%s666 + $0x338] sm:%s658] %v729
              $region95: #{up_conv_forward.3} parent=89 // loop_footer
                %s664 = sadd.s32 1, %s660
              $region96: #{up_conv_forward.3} parent=89 // loop_footer_branch
                %659 = sbr.rel target = $region92
              $region97: #{up_conv_forward.3} parent=89 // loop_exit
                _
            $region90: #{up_conv_forward.3} parent=81 // pred_fallthru
              _
          $region82: #{up_conv_forward.3} parent=77 // pred_fallthru
            _
          %807 = vnop
        $region78: #{up_conv_forward.3} parent=69 // pred_fallthru
          _
      $region70: #{up_conv_forward.3} parent=5 // pred_fallthru
        _
      %p808 = scmp.le.s32.totalorder 2, %s10
      // Predicated region
      $region113: #{up_conv_forward.3} parent=5 // pred_check
        %p809 = pneg %p808
      $region114: #{up_conv_forward.3} parent=5 // pred_check_branch
        %811 = sbr.rel (%p809) target = $region116
      $region115: #{up_conv_forward.3} parent=5 // pred_region
        %s812 = ssub.s32 %s10, 2
        // Predicated region
        $region117: #{up_conv_forward.3} parent=115 // pred_check
          %p813 = pneg %p172
        $region118: #{up_conv_forward.3} parent=115 // pred_check_branch
          %815 = sbr.rel (%p813) target = $region120
        $region119: #{up_conv_forward.3} parent=115 // pred_region
          %s816 = sand.u32 %s157, 1
          %s817 = sand.u32 %s157, 1
          %s818 = smul.addr %s817, 256
          %s819 = scalar_lea.vmem [#allocation3], %s818
        $region120: #{up_conv_forward.3} parent=115 // pred_fallthru
          _
      $region116: #{up_conv_forward.3} parent=5 // pred_fallthru
        _
    $region6: #{up_conv_forward.3} parent=1 // loop_footer
      %s14 = sadd.s32 1, %s10
    $region7: #{up_conv_forward.3} parent=1 // loop_footer_branch
      %9 = sbr.rel target = $region3
    $region8: #{up_conv_forward.3} parent=1 // loop_exit
      _

// kernel: up_conv_forward.2
$region0: #{up_conv_forward.2}
  #allocation0 [shape = 'u32[]', space=smem, size = 0x4, offset = 0x4, fixed_abs, tag = 'smem constant byte address 0x4 - core index']
  #allocation1 [shape = 'u32[72,128]{1,0:T(1,128)}', space=vmem, size = 0x9000, scoped, tag = 'internal scratch']
  %s0 = inlined_call_operand.vmem [shape: bf16[2,18,18,4], index: 0, kind: input, shape index: {}, may-alias: {0,1,2}]
  %s1 = inlined_call_operand.vmem [shape: bf16[2,18,18,4], index: 1, kind: input, shape index: {}, may-alias: {0,1,2}]
  %s2 = inlined_call_operand.vmem [shape: bf16[2,18,18,4], index: 2, kind: input, shape index: {}, may-alias: {0,1,2}]
  %s3 = inlined_call_operand.vmem [shape: bf16[4,16,4], index: 3, kind: input, shape index: {}]
  %s4 = inlined_call_operand.vmem [shape: f32[2,4,16,16,4], index: 4, kind: output, shape index: {0}]
  %s5 = inlined_call_operand.vmem [shape: f32[2,2,4], index: 5, kind: output, shape index: {1}]
  %6 = xla_tuple %s4, %s5
  %s7 = sld [smem:[#allocation0]]
  $region95: #{up_conv_forward.2} parent=0
    _
  %s9 = ssub.s32 1, %s7
  %s10 = scalar_select 0, %s9, %s7
  $region1: #{up_conv_forward.2} parent=0
    #allocation2 [shape = 'u8[262144]{0}', space=vmem, size = 0x40000, scoped, tag = 'output window, operand 0']
    loop: start=0, step=1, limit=10
    $region2: #{up_conv_forward.2} parent=1 // loop_pre_header
      _
    $region3: #{up_conv_forward.2} parent=1 // loop_header
      %s12 = sphi 0, %s16
      %p13 = scmp.ge.s32.totalorder %s12, 10
      %s19 = sphi 0, %s38
      %s20 = sphi 0, %s34
      %s21 = sphi 0, %s30
      %s22 = sphi 0, %s19
      %s23 = sphi 0, %s20
      %s24 = sphi 0, %s21
      %s25 = sphi 0, %s22
      %s26 = sphi 0, %s23
      %s27 = sphi 0, %s24
      %s43 = sphi 0, %s45
      %s46 = sphi 0, %s43
      %s47 = sphi 0, %s46
      %s63 = sphi 0, %s47
      %s75 = sphi 0, %s77
      %s78 = sphi 0, %s75
      %s79 = sphi 0, %s78
      %s95 = sphi 0, %s79
      %s109 = sphi 0, %s111
      %s112 = sphi 0, %s109
      %s113 = sphi 0, %s112
      %s129 = sphi 0, %s113
      %s135 = sphi 0, %s137
      %s138 = sphi 0, %s135
      %s139 = sphi 0, %s138
      %s155 = sphi 0, %s139
      %s165 = sphi 0, %s167
      %s168 = sphi 0, %s165
      %s169 = sphi 0, %s168
      %s185 = sphi 0, %s169
      %s193 = sphi 0, %s195
      %s196 = sphi 0, %s193
      %s197 = sphi 0, %s196
      %s213 = sphi 0, %s197
    $region4: #{up_conv_forward.2} parent=1 // loop_header_branch
      %15 = sbr.rel (%p13) target = $region8
    $region5: #{up_conv_forward.2} parent=1 // loop_body
      %s17 = ssub.s32 %s12, 1
      %s18 = ssub.s32 %s12, 2
      %s28 = sadd.s32 1, %s21
      %p29 = scmp.ge.s32.totalorder %s28, 4
      %s30 = scalar_select %p29, 0, %s28
      %s31 = sadd.s32 1, %s20
      %s32 = scalar_select %p29, %s31, %s20
      %p33 = scmp.ge.s32.totalorder %s32, 1
      %s34 = scalar_select %p33, 0, %s32
      %s35 = sadd.s32 1, %s19
      %s36 = scalar_select %p33, %s35, %s19
      %p37 = scmp.ge.s32.totalorder %s36, 2
      %s38 = scalar_select %p37, 0, %s36
      %s39 = ssub.s32 %s19, %s38
      %s40 = ssub.s32 %s21, %s30
      %s41 = sor.u32 %s39, %s40
      %p42 = scmp.eq.s32.totalorder %s41, 0
      %s44 = sadd.s32 %s43, 1
      %s45 = scalar_select %p42, %s43, %s44
      %p48 = pneg %p42
      %p49 = scmp.eq.s32.totalorder %s12, 7
      %p50 = por %p48, %p49
      %p51 = scmp.ne.s32.totalorder %s43, %s46
      %p52 = scmp.eq.s32.totalorder %s12, 0
      %p53 = por %p51, %p52
      %p54 = scmp.ne.s32.totalorder %s43, %s46
      %p55 = scmp.eq.s32.totalorder %s17, 7
      %p56 = por %p54, %p55
      %p57 = scmp.ne.s32.totalorder %s46, %s47
      %p58 = scmp.eq.s32.totalorder %s17, 0
      %p59 = por %p57, %p58
      %p60 = scmp.ne.s32.totalorder %s46, %s47
      %p61 = scmp.eq.s32.totalorder %s18, 7
      %p62 = por %p60, %p61
      %p64 = scmp.ne.s32.totalorder %s47, %s63
      %p65 = scmp.eq.s32.totalorder %s18, 0
      %p66 = por %p64, %p65
      %s67 = sadd.s32 %s21, 1
      %s68 = smul.u32 %s67, 4
      %s69 = sadd.s32 %s30, 1
      %s70 = smul.u32 %s69, 4
      %s71 = ssub.s32 %s19, %s38
      %s72 = ssub.s32 %s68, %s70
      %s73 = sor.u32 %s71, %s72
      %p74 = scmp.eq.s32.totalorder %s73, 0
      %s76 = sadd.s32 %s75, 1
      %s77 = scalar_select %p74, %s75, %s76
      %p80 = pneg %p74
      %p81 = scmp.eq.s32.totalorder %s12, 7
      %p82 = por %p80, %p81
      %p83 = scmp.ne.s32.totalorder %s75, %s78
      %p84 = scmp.eq.s32.totalorder %s12, 0
      %p85 = por %p83, %p84
      %p86 = scmp.ne.s32.totalorder %s75, %s78
      %p87 = scmp.eq.s32.totalorder %s17, 7
      %p88 = por %p86, %p87
      %p89 = scmp.ne.s32.totalorder %s78, %s79
      %p90 = scmp.eq.s32.totalorder %s17, 0
      %p91 = por %p89, %p90
      %p92 = scmp.ne.s32.totalorder %s78, %s79
      %p93 = scmp.eq.s32.totalorder %s18, 7
      %p94 = por %p92, %p93
      %p96 = scmp.ne.s32.totalorder %s79, %s95
      %p97 = scmp.eq.s32.totalorder %s18, 0
      %p98 = por %p96, %p97
      %s99 = sadd.s32 %s21, 1
      %s100 = smul.u32 %s99, 4
      %s101 = sadd.s32 %s100, 1
      %s102 = sadd.s32 %s30, 1
      %s103 = smul.u32 %s102, 4
      %s104 = sadd.s32 %s103, 1
      %s105 = ssub.s32 %s19, %s38
      %s106 = ssub.s32 %s101, %s104
      %s107 = sor.u32 %s105, %s106
      %p108 = scmp.eq.s32.totalorder %s107, 0
      %s110 = sadd.s32 %s109, 1
      %s111 = scalar_select %p108, %s109, %s110
      %p114 = pneg %p108
      %p115 = scmp.eq.s32.totalorder %s12, 7
      %p116 = por %p114, %p115
      %p117 = scmp.ne.s32.totalorder %s109, %s112
      %p118 = scmp.eq.s32.totalorder %s12, 0
      %p119 = por %p117, %p118
      %p120 = scmp.ne.s32.totalorder %s109, %s112
      %p121 = scmp.eq.s32.totalorder %s17, 7
      %p122 = por %p120, %p121
      %p123 = scmp.ne.s32.totalorder %s112, %s113
      %p124 = scmp.eq.s32.totalorder %s17, 0
      %p125 = por %p123, %p124
      %p126 = scmp.ne.s32.totalorder %s112, %s113
      %p127 = scmp.eq.s32.totalorder %s18, 7
      %p128 = por %p126, %p127
      %p130 = scmp.ne.s32.totalorder %s113, %s129
      %p131 = scmp.eq.s32.totalorder %s18, 0
      %p132 = por %p130, %p131
      %s133 = ssub.s32 %s20, %s34
      %p134 = scmp.eq.s32.totalorder %s133, 0
      %s136 = sadd.s32 %s135, 1
      %s137 = scalar_select %p134, %s135, %s136
      %p140 = pneg %p134
      %p141 = scmp.eq.s32.totalorder %s12, 7
      %p142 = por %p140, %p141
      %p143 = scmp.ne.s32.totalorder %s135, %s138
      %p144 = scmp.eq.s32.totalorder %s12, 0
      %p145 = por %p143, %p144
      %p146 = scmp.ne.s32.totalorder %s135, %s138
      %p147 = scmp.eq.s32.totalorder %s17, 7
      %p148 = por %p146, %p147
      %p149 = scmp.ne.s32.totalorder %s138, %s139
      %p150 = scmp.eq.s32.totalorder %s17, 0
      %p151 = por %p149, %p150
      %p152 = scmp.ne.s32.totalorder %s138, %s139
      %p153 = scmp.eq.s32.totalorder %s18, 7
      %p154 = por %p152, %p153
      %p156 = scmp.ne.s32.totalorder %s139, %s155
      %p157 = scmp.eq.s32.totalorder %s18, 0
      %p158 = por %p156, %p157
      %s159 = ssub.s32 %s19, %s38
      %s160 = ssub.s32 %s21, %s30
      %s161 = sor.u32 %s159, %s160
      %s162 = ssub.s32 %s20, %s34
      %s163 = sor.u32 %s161, %s162
      %p164 = scmp.eq.s32.totalorder %s163, 0
      %s166 = sadd.s32 %s165, 1
      %s167 = scalar_select %p164, %s165, %s166
      %p170 = pneg %p164
      %p171 = scmp.eq.s32.totalorder %s12, 7
      %p172 = por %p170, %p171
      %p173 = scmp.ne.s32.totalorder %s165, %s168
      %p174 = scmp.eq.s32.totalorder %s12, 0
      %p175 = por %p173, %p174
      %p176 = scmp.ne.s32.totalorder %s165, %s168
      %p177 = scmp.eq.s32.totalorder %s17, 7
      %p178 = por %p176, %p177
      %p179 = scmp.ne.s32.totalorder %s168, %s169
      %p180 = scmp.eq.s32.totalorder %s17, 0
      %p181 = por %p179, %p180
      %p182 = scmp.ne.s32.totalorder %s168, %s169
      %p183 = scmp.eq.s32.totalorder %s18, 7
      %p184 = por %p182, %p183
      %p186 = scmp.ne.s32.totalorder %s169, %s185
      %p187 = scmp.eq.s32.totalorder %s18, 0
      %p188 = por %p186, %p187
      %s189 = ssub.s32 %s19, %s38
      %s190 = ssub.s32 %s20, %s34
      %s191 = sor.u32 %s189, %s190
      %p192 = scmp.eq.s32.totalorder %s191, 0
      %s194 = sadd.s32 %s193, 1
      %s195 = scalar_select %p192, %s193, %s194
      %p198 = pneg %p192
      %p199 = scmp.eq.s32.totalorder %s12, 7
      %p200 = por %p198, %p199
      %p201 = scmp.ne.s32.totalorder %s193, %s196
      %p202 = scmp.eq.s32.totalorder %s12, 0
      %p203 = por %p201, %p202
      %p204 = scmp.ne.s32.totalorder %s193, %s196
      %p205 = scmp.eq.s32.totalorder %s17, 7
      %p206 = por %p204, %p205
      %p207 = scmp.ne.s32.totalorder %s196, %s197
      %p208 = scmp.eq.s32.totalorder %s17, 0
      %p209 = por %p207, %p208
      %p210 = scmp.ne.s32.totalorder %s196, %s197
      %p211 = scmp.eq.s32.totalorder %s18, 7
      %p212 = por %p210, %p211
      %p214 = scmp.ne.s32.totalorder %s197, %s213
      %p215 = scmp.eq.s32.totalorder %s18, 0
      %p216 = por %p214, %p215
      %p217 = scmp.le.s32.totalorder 1, %s12
      %p218 = scmp.lt.s32.totalorder %s12, 9
      %p219 = pnand %p217, %p218
      %p220 = pneg %p219
      // Predicated region
      $region9: #{up_conv_forward.2} parent=5 // pred_check
        _
      $region10: #{up_conv_forward.2} parent=5 // pred_check_branch
        %222 = sbr.rel (%p219) target = $region12
      $region11: #{up_conv_forward.2} parent=5 // pred_region
        %s223 = ssub.s32 %s12, 1
        // Predicated region
        $region13: #{up_conv_forward.2} parent=11 // pred_check
          %p224 = pneg %p151
        $region14: #{up_conv_forward.2} parent=11 // pred_check_branch
          %226 = sbr.rel (%p224) target = $region16
        $region15: #{up_conv_forward.2} parent=11 // pred_region
          %p227 = scmp.lt.s32.totalorder %s23, 0
          %s228 = scalar_select %p227, %s23, 0
          %s229 = smul.addr %s228, 4
          %s230 = scalar_lea.vmem %s3, %s229
        $region16: #{up_conv_forward.2} parent=11 // pred_fallthru
          _
      $region12: #{up_conv_forward.2} parent=5 // pred_fallthru
        _
      %p231 = scmp.lt.s32.totalorder %s12, 8
      // Predicated region
      $region17: #{up_conv_forward.2} parent=5 // pred_check
        %p232 = pneg %p231
      $region18: #{up_conv_forward.2} parent=5 // pred_check_branch
        %234 = sbr.rel (%p232) target = $region20
      $region19: #{up_conv_forward.2} parent=5 // pred_region
        // Predicated region
        $region21: #{up_conv_forward.2} parent=19 // pred_check
          %p235 = pneg %p53
        $region22: #{up_conv_forward.2} parent=19 // pred_check_branch
          %237 = sbr.rel (%p235) target = $region24
        $region23: #{up_conv_forward.2} parent=19 // pred_region
          %s238 = smul.u32 4, %s21
          %s239 = ssub.s32 18, %s238
          %p240 = scmp.lt.s32.totalorder %s239, 4
          %s241 = scalar_select %p240, %s239, 4
          %s242 = smul.u32 4, %s241
          %s243 = smul.u32 %s242, 3
          %p244 = scmp.lt.s32.totalorder %s19, 1
          %s245 = scalar_select %p244, %s19, 1
          %p246 = scmp.lt.s32.totalorder %s238, 17
          %s247 = scalar_select %p246, %s238, 17
          %s248 = smul.addr %s247, 3
          %s249 = smul.addr %s245, 54
          %s250 = sadd.s32 %s248, %s249
          %s251 = smul.addr %s250, 4
          %s252 = scalar_lea.vmem %s0, %s251
          %s253 = smul.u32 4, %s21
          %s254 = ssub.s32 18, %s253
          %p255 = scmp.lt.s32.totalorder %s254, 4
          %s256 = scalar_select %p255, %s254, 4
          %s257 = smul.u32 4, %s256
          %s258 = smul.u32 %s257, 3
        $region24: #{up_conv_forward.2} parent=19 // pred_fallthru
          _
        // Predicated region
        $region25: #{up_conv_forward.2} parent=19 // pred_check
          %p259 = pneg %p85
        $region26: #{up_conv_forward.2} parent=19 // pred_check_branch
          %261 = sbr.rel (%p259) target = $region28
        $region27: #{up_conv_forward.2} parent=19 // pred_region
          %s262 = sadd.s32 %s21, 1
          %s263 = smul.u32 %s262, 4
          %p264 = scmp.lt.s32.totalorder %s19, 1
          %s265 = scalar_select %p264, %s19, 1
          %p266 = scmp.lt.s32.totalorder %s263, 17
          %s267 = scalar_select %p266, %s263, 17
          %s268 = smul.addr %s267, 3
          %s269 = smul.addr %s265, 54
          %s270 = sadd.s32 %s268, %s269
          %s271 = smul.addr %s270, 4
          %s272 = scalar_lea.vmem %s1, %s271
          %s273 = sadd.s32 %s21, 1
          %s274 = smul.u32 %s273, 4
        $region28: #{up_conv_forward.2} parent=19 // pred_fallthru
          _
        // Predicated region
        $region29: #{up_conv_forward.2} parent=19 // pred_check
          %p275 = pneg %p119
        $region30: #{up_conv_forward.2} parent=19 // pred_check_branch
          %277 = sbr.rel (%p275) target = $region32
        $region31: #{up_conv_forward.2} parent=19 // pred_region
          %s278 = sadd.s32 %s21, 1
          %s279 = smul.u32 %s278, 4
          %s280 = sadd.s32 %s279, 1
          %p281 = scmp.lt.s32.totalorder %s19, 1
          %s282 = scalar_select %p281, %s19, 1
          %p283 = scmp.lt.s32.totalorder %s280, 17
          %s284 = scalar_select %p283, %s280, 17
          %s285 = smul.addr %s284, 3
          %s286 = smul.addr %s282, 54
          %s287 = sadd.s32 %s285, %s286
          %s288 = smul.addr %s287, 4
          %s289 = scalar_lea.vmem %s2, %s288
          %s290 = sadd.s32 %s21, 1
          %s291 = smul.u32 %s290, 4
          %s292 = sadd.s32 %s291, 1
        $region32: #{up_conv_forward.2} parent=19 // pred_fallthru
          _
      $region20: #{up_conv_forward.2} parent=5 // pred_fallthru
        _
      %p293 = scmp.le.s32.totalorder 1, %s12
      %p294 = scmp.lt.s32.totalorder %s12, 9
      %p295 = pnand %p293, %p294
      %p296 = pneg %p295
      // Predicated region
      $region33: #{up_conv_forward.2} parent=5 // pred_check
        _
      $region34: #{up_conv_forward.2} parent=5 // pred_check_branch
        %298 = sbr.rel (%p295) target = $region36
      $region35: #{up_conv_forward.2} parent=5 // pred_region
        %s299 = ssub.s32 %s12, 1
        %s300 = smul.u32 4, %s24
        %s301 = ssub.s32 18, %s300
        %p302 = scmp.lt.s32.totalorder %s301, 4
        %s303 = scalar_select %p302, %s301, 4
        %s304 = smul.u32 4, %s303
        %s305 = smul.u32 %s304, 3
        %p306 = scmp.lt.s32.totalorder %s22, 1
        %s307 = scalar_select %p306, %s22, 1
        %p308 = scmp.lt.s32.totalorder %s300, 17
        %s309 = scalar_select %p308, %s300, 17
        %s310 = smul.addr %s309, 3
        %s311 = smul.addr %s307, 54
        %s312 = sadd.s32 %s310, %s311
        %s313 = smul.addr %s312, 4
        %s314 = scalar_lea.vmem %s0, %s313
        %p315 = pneg %p59
        %p316 = pneg %p56
        %s317 = sadd.s32 %s24, 1
        %s318 = smul.u32 %s317, 4
        %p319 = scmp.lt.s32.totalorder %s22, 1
        %s320 = scalar_select %p319, %s22, 1
        %p321 = scmp.lt.s32.totalorder %s318, 17
        %s322 = scalar_select %p321, %s318, 17
        %s323 = smul.addr %s322, 3
        %s324 = smul.addr %s320, 54
        %s325 = sadd.s32 %s323, %s324
        %s326 = smul.addr %s325, 4
        %s327 = scalar_lea.vmem %s1, %s326
        %p328 = pneg %p91
        %p329 = pneg %p88
        %s330 = sadd.s32 %s24, 1
        %s331 = smul.u32 %s330, 4
        %s332 = sadd.s32 %s331, 1
        %p333 = scmp.lt.s32.totalorder %s22, 1
        %s334 = scalar_select %p333, %s22, 1
        %p335 = scmp.lt.s32.totalorder %s332, 17
        %s336 = scalar_select %p335, %s332, 17
        %s337 = smul.addr %s336, 3
        %s338 = smul.addr %s334, 54
        %s339 = sadd.s32 %s337, %s338
        %s340 = smul.addr %s339, 4
        %s341 = scalar_lea.vmem %s2, %s340
        %p342 = pneg %p125
        %p343 = pneg %p122
        %p344 = scmp.lt.s32.totalorder %s23, 0
        %s345 = scalar_select %p344, %s23, 0
        %s346 = smul.addr %s345, 4
        %s347 = scalar_lea.vmem %s3, %s346
        %p348 = pneg %p151
        %p349 = pneg %p148
        %p350 = pneg %p181
        %p351 = pneg %p178
        %s352 = sand.u32 %s168, 1
        %s353 = sand.u32 %s168, 1
        %s354 = smul.addr %s353, 256
        %s355 = scalar_lea.vmem [#allocation2], %s354
        %p356 = pneg %p209
        %p357 = pneg %p206
        %p358 = scmp.lt.s32.totalorder %s22, 1
        %s359 = scalar_select %p358, %s22, 1
        %p360 = scmp.lt.s32.totalorder %s23, 0
        %s361 = scalar_select %p360, %s23, 0
        %s362 = sadd.s32 %s361, %s359
        %s363 = smul.addr %s362, 2
        %s364 = scalar_lea.vmem %s5, %s363
        %s365 = smul.u32 4, %s24
        %s366 = ssub.s32 18, %s365
        %p367 = scmp.lt.s32.totalorder %s366, 4
        %s368 = scalar_select %p367, %s366, 4
        %s369 = smul.u32 4, %s368
        %s370 = smul.u32 %s369, 3
        %p371 = scmp.lt.s32.totalorder %s22, 1
        %s372 = scalar_select %p371, %s22, 1
        %p373 = scmp.lt.s32.totalorder %s365, 17
        %s374 = scalar_select %p373, %s365, 17
        %s375 = smul.addr %s374, 3
        %s376 = smul.addr %s372, 54
        %s377 = sadd.s32 %s375, %s376
        %s378 = smul.addr %s377, 4
        %s379 = scalar_lea.vmem %s0, %s378
        %s380 = smul.u32 4, %s24
        %s381 = ssub.s32 18, %s380
        %p382 = scmp.lt.s32.totalorder %s381, 4
        %s383 = scalar_select %p382, %s381, 4
        %s384 = smul.u32 4, %s383
        %s385 = smul.u32 %s384, 3
        %s386 = sadd.s32 %s24, 1
        %s387 = smul.u32 %s386, 4
        %p388 = scmp.lt.s32.totalorder %s22, 1
        %s389 = scalar_select %p388, %s22, 1
        %p390 = scmp.lt.s32.totalorder %s387, 17
        %s391 = scalar_select %p390, %s387, 17
        %s392 = smul.addr %s391, 3
        %s393 = smul.addr %s389, 54
        %s394 = sadd.s32 %s392, %s393
        %s395 = smul.addr %s394, 4
        %s396 = scalar_lea.vmem %s1, %s395
        %s397 = sadd.s32 %s24, 1
        %s398 = smul.u32 %s397, 4
        %s399 = sadd.s32 %s24, 1
        %s400 = smul.u32 %s399, 4
        %s401 = sadd.s32 %s400, 1
        %p402 = scmp.lt.s32.totalorder %s22, 1
        %s403 = scalar_select %p402, %s22, 1
        %p404 = scmp.lt.s32.totalorder %s401, 17
        %s405 = scalar_select %p404, %s401, 17
        %s406 = smul.addr %s405, 3
        %s407 = smul.addr %s403, 54
        %s408 = sadd.s32 %s406, %s407
        %s409 = smul.addr %s408, 4
        %s410 = scalar_lea.vmem %s2, %s409
        %s411 = sadd.s32 %s24, 1
        %s412 = smul.u32 %s411, 4
        %s413 = sadd.s32 %s412, 1
        %p414 = scmp.lt.s32.totalorder %s23, 0
        %s415 = scalar_select %p414, %s23, 0
        %s416 = smul.addr %s415, 4
        %s417 = scalar_lea.vmem %s3, %s416
        %s418 = smul.u32 4, %s24
        %p419 = scmp.lt.s32.totalorder %s22, 1
        %s420 = scalar_select %p419, %s22, 1
        %p421 = scmp.lt.s32.totalorder %s23, 0
        %s422 = scalar_select %p421, %s23, 0
        %s423 = sadd.s32 %s422, %s420
        %s424 = smul.addr %s423, 2
        %s425 = scalar_lea.vmem %s5, %s424
        %p427 = scmp.eq.s32.totalorder %s24, 0
        // Predicated region
        $region37: #{up_conv_forward.2} parent=35 // pred_check
          %p428 = pneg %p427
        $region38: #{up_conv_forward.2} parent=35 // pred_check_branch
          %430 = sbr.rel (%p428) target = $region40
        $region39: #{up_conv_forward.2} parent=35 // pred_region
          %vm431 = vcmask 25600
          %432 = vst.msk [vmem:[%s425] sm:$0x3] %vm431, 0.0
        $region40: #{up_conv_forward.2} parent=35 // pred_fallthru
          _
        %v433 = vld [vmem:[%s379] sm:$0xf]
        %v434 = vld [vmem:[%s379 + $0x4] sm:$0xf]
        %v435 = vld [vmem:[%s379 + $0x8] sm:$0x1]
        %v436 = vld [vmem:[%s379 + $0xc] sm:$0xf]
        %v437 = vld [vmem:[%s379 + $0x10] sm:$0xf]
        %v438 = vld [vmem:[%s379 + $0x14] sm:$0x1]
        %v439 = vld [vmem:[%s379 + $0x18] sm:$0xf]
        %v440 = vld [vmem:[%s379 + $0x1c] sm:$0xf]
        %v441 = vld [vmem:[%s379 + $0x20] sm:$0x1]
        %v442 = vld [vmem:[%s379 + $0x24] sm:$0xf]
        %v443 = vld [vmem:[%s379 + $0x28] sm:$0xf]
        %v444 = vld [vmem:[%s379 + $0x2c] sm:$0x1]
        %v445 = vld [vmem:[%s396] sm:$0xf]
        %v446 = vld [vmem:[%s396 + $0x4] sm:$0xf]
        %v447 = vld [vmem:[%s396 + $0x8] sm:$0x1]
        %v448 = vld [vmem:[%s410] sm:$0xf]
        %v449 = vld [vmem:[%s410 + $0x4] sm:$0xf]
        %v450 = vld [vmem:[%s410 + $0x8] sm:$0x1]
        %v459 = vunpack.c.l.b16 %v433
        %v460 = vunpack.c.l.b16 %v434
        %v461 = vunpack.c.l.b16 %v436
        %v462 = vunpack.c.l.b16 %v437
        %v463 = vunpack.c.l.b16 %v439
        %v464 = vunpack.c.l.b16 %v440
        %v465 = vunpack.c.l.b16 %v442
        %v466 = vunpack.c.l.b16 %v443
        %v467 = vpack.c.b16 %v460, %v459
        %v468 = vpack.c.b16 %v462, %v461
        %v469 = vpack.c.b16 %v464, %v463
        %v470 = vpack.c.b16 %v466, %v465
        %v475 = vunpack.c.l.b16 %v435
        %v476 = vunpack.c.l.b16 %v438
        %v477 = vunpack.c.l.b16 %v441
        %v478 = vunpack.c.l.b16 %v444
        %v479 = vpack.c.b16 %v475, %v475
        %v480 = vpack.c.b16 %v476, %v476
        %v481 = vpack.c.b16 %v477, %v477
        %v482 = vpack.c.b16 %v478, %v478
        %vm483 = vsmask.f32 7424
        %v485 = vshrl.u32 %v467, 16
        %v487 = vshll.u32 %v467, 16
        %v489 = vrot.slane %v487, 1
        %v490 = vor.u32 %v485, %v489
        %v492 = vshll.u32 %v479, 16
        %v494 = vrot.slane %v492, 1
        %v495 = vsel %vm483, %v490, %v494
        %v497 = vshrl.u32 %v468, 16
        %v499 = vshll.u32 %v468, 16
        %v501 = vrot.slane %v499, 1
        %v502 = vor.u32 %v497, %v501
        %v504 = vshll.u32 %v480, 16
        %v506 = vrot.slane %v504, 1
        %v507 = vsel %vm483, %v502, %v506
        %v509 = vshrl.u32 %v469, 16
        %v511 = vshll.u32 %v469, 16
        %v513 = vrot.slane %v511, 1
        %v514 = vor.u32 %v509, %v513
        %v516 = vshll.u32 %v481, 16
        %v518 = vrot.slane %v516, 1
        %v519 = vsel %vm483, %v514, %v518
        %v521 = vshrl.u32 %v470, 16
        %v523 = vshll.u32 %v470, 16
        %v525 = vrot.slane %v523, 1
        %v526 = vor.u32 %v521, %v525
        %v528 = vshll.u32 %v482, 16
        %v530 = vrot.slane %v528, 1
        %v531 = vsel %vm483, %v526, %v530
        %532 = vrot.lane.b32.xlu0 %v495, 4
        %v533 = vpop.permute.xlu0 %532
        %534 = vrot.lane.b32.xlu0 %v507, 4
        %v535 = vpop.permute.xlu0 %534
        %536 = vrot.lane.b32.xlu0 %v519, 4
        %v537 = vpop.permute.xlu0 %536
        %538 = vrot.lane.b32.xlu0 %v531, 4
        %v539 = vpop.permute.xlu0 %538
        %v542 = vunpack.c.l.b16 %v445
        %v543 = vunpack.c.l.b16 %v446
        %v544 = vpack.c.b16 %v543, %v542
        %545 = vrot.lane.b32.xlu0 %v468, 8
        %v546 = vpop.permute.xlu0 %545
        %547 = vrot.lane.b32.xlu0 %v469, 8
        %v548 = vpop.permute.xlu0 %547
        %549 = vrot.lane.b32.xlu0 %v470, 8
        %v550 = vpop.permute.xlu0 %549
        %551 = vrot.lane.b32.xlu0 %v544, 8
        %v552 = vpop.permute.xlu0 %551
        %v554 = vunpack.c.l.b16 %v447
        %v555 = vpack.c.b16 %v554, %v554
        %v557 = vshrl.u32 %v544, 16
        %v559 = vshll.u32 %v544, 16
        %v561 = vrot.slane %v559, 1
        %v562 = vor.u32 %v557, %v561
        %v564 = vshll.u32 %v555, 16
        %v566 = vrot.slane %v564, 1
        %v567 = vsel %vm483, %v562, %v566
        %568 = vrot.lane.b32.xlu0 %v507, 12
        %v569 = vpop.permute.xlu0 %568
        %570 = vrot.lane.b32.xlu0 %v519, 12
        %v571 = vpop.permute.xlu0 %570
        %572 = vrot.lane.b32.xlu0 %v531, 12
        %v573 = vpop.permute.xlu0 %572
        %574 = vrot.lane.b32.xlu0 %v567, 12
        %v575 = vpop.permute.xlu0 %574
        %vm576 = vcmask 31744
        %v578 = vsel %vm576, %v467, %v533
        %v580 = vsel %vm576, %v468, %v535
        %v582 = vsel %vm576, %v469, %v537
        %v584 = vsel %vm576, %v470, %v539
        %vm585 = vcmask 64512
        %v587 = vsel %vm585, %v578, %v546
        %v589 = vsel %vm585, %v580, %v548
        %v591 = vsel %vm585, %v582, %v550
        %v593 = vsel %vm585, %v584, %v552
        %vm594 = vcmask 97280
        %v596 = vsel %vm594, %v587, %v569
        %v598 = vsel %vm594, %v589, %v571
        %v600 = vsel %vm594, %v591, %v573
        %v602 = vsel %vm594, %v593, %v575
        %v603 = vld [vmem:[%s417] sm:$0xf]
        %v604 = vld [vmem:[%s417 + $0x4] sm:$0xf]
        %v607 = vunpack.c.l.b16 %v603
        %v608 = vunpack.c.l.b16 %v604
        %v609 = vpack.c.b16 %v608, %v607
        %vm611 = vcmask 130048
        %v612 = vsel %vm611, %v596, 0
        %v614 = vsel %vm611, %v598, 0
        %v616 = vsel %vm611, %v600, 0
        %v618 = vsel %vm611, %v602, 0
        %620 = vmatpush.bf16.msra.mxu0 0
        %621 = vmatpush.bf16.msra.mxu0 0
        %622 = vmatpush.bf16.msra.mxu0 0
        %623 = vmatpush.bf16.msra.mxu0 0
        %624 = vmatpush.bf16.msra.mxu0 0
        %625 = vmatpush.bf16.msra.mxu0 0
        %626 = vmatpush.bf16.msra.mxu0 0
        %627 = vmatpush.bf16.msra.mxu0 %v609
        %628 = vmatmul.bf16.gmra.mxu0 %v612
        %v629 = vpop.f32.mrf.mxu0
        %v630 = vadd.f32 0.0, %v629
        %v631 = vpop.f32.mrf.mxu0
        %v632 = vadd.f32 0.0, %v631
        %633 = vmatmul.bf16.gmra.mxu0 %v614
        %v634 = vpop.f32.mrf.mxu0
        %v635 = vadd.f32 0.0, %v634
        %v636 = vpop.f32.mrf.mxu0
        %v637 = vadd.f32 0.0, %v636
        %638 = vmatmul.bf16.gmra.mxu0 %v616
        %v639 = vpop.f32.mrf.mxu0
        %v640 = vadd.f32 0.0, %v639
        %v641 = vpop.f32.mrf.mxu0
        %v642 = vadd.f32 0.0, %v641
        %643 = vmatmul.bf16.gmra.mxu0 %v618
        %v644 = vpop.f32.mrf.mxu0
        %v645 = vadd.f32 0.0, %v644
        %v646 = vpop.f32.mrf.mxu0
        %v647 = vadd.f32 0.0, %v646
        %648 = vdwg.mxu0
        %649 = vst.msk [vmem:[%s355] sm:$0xff] %vm576, %v630
        %650 = vst.msk [vmem:[%s355 + $0x8] sm:$0xff] %vm576, %v632
        %651 = vst.msk [vmem:[%s355 + $0x10] sm:$0xff] %vm576, %v635
        %652 = vst.msk [vmem:[%s355 + $0x18] sm:$0xff] %vm576, %v637
        %653 = vst.msk [vmem:[%s355 + $0x20] sm:$0xff] %vm576, %v640
        %654 = vst.msk [vmem:[%s355 + $0x28] sm:$0xff] %vm576, %v642
        %655 = vst.msk [vmem:[%s355 + $0x30] sm:$0xff] %vm576, %v645
        %656 = vst.msk [vmem:[%s355 + $0x38] sm:$0xff] %vm576, %v647
        %v657 = vsel %vm576, %v630, 0.0
        %v658 = vsel %vm576, %v632, 0.0
        %v659 = vadd.f32 %v657, %v658
        %v660 = vsel %vm576, %v635, 0.0
        %v661 = vadd.f32 %v659, %v660
        %v662 = vsel %vm576, %v637, 0.0
        %v663 = vadd.f32 %v661, %v662
        %v664 = vsel %vm576, %v640, 0.0
        %v665 = vadd.f32 %v663, %v664
        %v666 = vsel %vm576, %v642, 0.0
        %v667 = vadd.f32 %v665, %v666
        %v668 = vsel %vm576, %v645, 0.0
        %v669 = vadd.f32 %v667, %v668
        %v670 = vsel %vm576, %v647, 0.0
        %v671 = vadd.f32 %v669, %v670
        %v672 = vrot.slane %v671, 4
        %v673 = vadd.f32 %v671, %v672
        %v674 = vrot.slane %v673, 2
        %v675 = vadd.f32 %v673, %v674
        %v676 = vrot.slane %v675, 1
        %v677 = vadd.f32 %v675, %v676
        %v678 = vadd.f32 %v677, 0.0
        %v679 = vmul.f32 %v630, %v630
        %v680 = vmul.f32 %v632, %v632
        %v681 = vmul.f32 %v635, %v635
        %v682 = vmul.f32 %v637, %v637
        %v683 = vmul.f32 %v640, %v640
        %v684 = vmul.f32 %v642, %v642
        %v685 = vmul.f32 %v645, %v645
        %v686 = vmul.f32 %v647, %v647
        %v687 = vsel %vm576, %v679, 0.0
        %v688 = vsel %vm576, %v680, 0.0
        %v689 = vadd.f32 %v687, %v688
        %v690 = vsel %vm576, %v681, 0.0
        %v691 = vadd.f32 %v689, %v690
        %v692 = vsel %vm576, %v682, 0.0
        %v693 = vadd.f32 %v691, %v692
        %v694 = vsel %vm576, %v683, 0.0
        %v695 = vadd.f32 %v693, %v694
        %v696 = vsel %vm576, %v684, 0.0
        %v697 = vadd.f32 %v695, %v696
        %v698 = vsel %vm576, %v685, 0.0
        %v699 = vadd.f32 %v697, %v698
        %v700 = vsel %vm576, %v686, 0.0
        %v701 = vadd.f32 %v699, %v700
        %v702 = vrot.slane %v701, 4
        %v703 = vadd.f32 %v701, %v702
        %v704 = vrot.slane %v703, 2
        %v705 = vadd.f32 %v703, %v704
        %v706 = vrot.slane %v705, 1
        %v707 = vadd.f32 %v705, %v706
        %v708 = vadd.f32 %v707, 0.0
        %v709 = vshrl.u32 %v479, 16
        %v711 = vshrl.u32 %v480, 16
        %v713 = vshrl.u32 %v481, 16
        %v715 = vshrl.u32 %v482, 16
        %717 = vrot.lane.b32.xlu0 %v709, 4
        %v718 = vpop.permute.xlu0 %717
        %719 = vrot.lane.b32.xlu0 %v711, 4
        %v720 = vpop.permute.xlu0 %719
        %721 = vrot.lane.b32.xlu0 %v713, 4
        %v722 = vpop.permute.xlu0 %721
        %723 = vrot.lane.b32.xlu0 %v715, 4
        %v724 = vpop.permute.xlu0 %723
        %725 = vrot.lane.b32.xlu0 %v480, 8
        %v726 = vpop.permute.xlu0 %725
        %727 = vrot.lane.b32.xlu0 %v481, 8
        %v728 = vpop.permute.xlu0 %727
        %729 = vrot.lane.b32.xlu0 %v482, 8
        %v730 = vpop.permute.xlu0 %729
        %731 = vrot.lane.b32.xlu0 %v555, 8
        %v732 = vpop.permute.xlu0 %731
        %v733 = vshrl.u32 %v555, 16
        %735 = vrot.lane.b32.xlu0 %v711, 12
        %v736 = vpop.permute.xlu0 %735
        %737 = vrot.lane.b32.xlu0 %v713, 12
        %v738 = vpop.permute.xlu0 %737
        %739 = vrot.lane.b32.xlu0 %v715, 12
        %v740 = vpop.permute.xlu0 %739
        %741 = vrot.lane.b32.xlu0 %v733, 12
        %v742 = vpop.permute.xlu0 %741
        %v744 = vsel %vm576, %v479, %v718
        %v746 = vsel %vm576, %v480, %v720
        %v748 = vsel %vm576, %v481, %v722
        %v750 = vsel %vm576, %v482, %v724
        %v752 = vsel %vm585, %v744, %v726
        %v754 = vsel %vm585, %v746, %v728
        %v756 = vsel %vm585, %v748, %v730
        %v758 = vsel %vm585, %v750, %v732
        %v760 = vsel %vm594, %v752, %v736
        %v762 = vsel %vm594, %v754, %v738
        %v764 = vsel %vm594, %v756, %v740
        %v766 = vsel %vm594, %v758, %v742
        %v767 = vshrl.u32 %v596, 16
        %v769 = vshll.u32 %v596, 16
        %v771 = vrot.slane %v769, 1
        %v772 = vor.u32 %v767, %v771
        %v773 = vshll.u32 %v760, 16
        %v775 = vrot.slane %v773, 1
        %v776 = vsel %vm483, %v772, %v775
        %v777 = vshrl.u32 %v598, 16
        %v779 = vshll.u32 %v598, 16
        %v781 = vrot.slane %v779, 1
        %v782 = vor.u32 %v777, %v781
        %v783 = vshll.u32 %v762, 16
        %v785 = vrot.slane %v783, 1
        %v786 = vsel %vm483, %v782, %v785
        %v787 = vshrl.u32 %v600, 16
        %v789 = vshll.u32 %v600, 16
        %v791 = vrot.slane %v789, 1
        %v792 = vor.u32 %v787, %v791
        %v793 = vshll.u32 %v764, 16
        %v795 = vrot.slane %v793, 1
        %v796 = vsel %vm483, %v792, %v795
        %v797 = vshrl.u32 %v602, 16
        %v799 = vshll.u32 %v602, 16
        %v801 = vrot.slane %v799, 1
        %v802 = vor.u32 %v797, %v801
        %v803 = vshll.u32 %v766, 16
        %v805 = vrot.slane %v803, 1
        %v806 = vsel %vm483, %v802, %v805
        %s807 = scalar_lea.vmem %s417, 8
        %v808 = vld [vmem:[%s807] sm:$0xf]
        %v809 = vld [vmem:[%s807 + $0x4] sm:$0xf]
        %v812 = vunpack.c.l.b16 %v808
        %v813 = vunpack.c.l.b16 %v809
        %v814 = vpack.c.b16 %v813, %v812
        %v817 = vsel %vm611, %v776, 0
        %v820 = vsel %vm611, %v786, 0
        %v823 = vsel %vm611, %v796, 0
        %v826 = vsel %vm611, %v806, 0
        %828 = vmatpush.bf16.msra.mxu0 0
        %829 = vmatpush.bf16.msra.mxu0 0
        %830 = vmatpush.bf16.msra.mxu0 0
        %831 = vmatpush.bf16.msra.mxu0 0
        %832 = vmatpush.bf16.msra.mxu0 0
        %833 = vmatpush.bf16.msra.mxu0 0
        %834 = vmatpush.bf16.msra.mxu0 0
        %835 = vmatpush.bf16.msra.mxu0 %v814
        %836 = vmatmul.bf16.gmra.mxu0 %v817
        %v837 = vpop.f32.mrf.mxu0
        %v838 = vadd.f32 0.0, %v837
        %v839 = vpop.f32.mrf.mxu0
        %v840 = vadd.f32 0.0, %v839
        %841 = vmatmul.bf16.gmra.mxu0 %v820
        %v842 = vpop.f32.mrf.mxu0
        %v843 = vadd.f32 0.0, %v842
        %v844 = vpop.f32.mrf.mxu0
        %v845 = vadd.f32 0.0, %v844
        %846 = vmatmul.bf16.gmra.mxu0 %v823
        %v847 = vpop.f32.mrf.mxu0
        %v848 = vadd.f32 0.0, %v847
        %v849 = vpop.f32.mrf.mxu0
        %v850 = vadd.f32 0.0, %v849
        %851 = vmatmul.bf16.gmra.mxu0 %v826
        %v852 = vpop.f32.mrf.mxu0
        %v853 = vadd.f32 0.0, %v852
        %v854 = vpop.f32.mrf.mxu0
        %v855 = vadd.f32 0.0, %v854
        %856 = vdwg.mxu0
        %s857 = scalar_lea.vmem %s355, 64 [#allocation2]
        %858 = vst.msk [vmem:[%s857] sm:$0xff] %vm576, %v838
        %859 = vst.msk [vmem:[%s857 + $0x8] sm:$0xff] %vm576, %v840
        %860 = vst.msk [vmem:[%s857 + $0x10] sm:$0xff] %vm576, %v843
        %861 = vst.msk [vmem:[%s857 + $0x18] sm:$0xff] %vm576, %v845
        %862 = vst.msk [vmem:[%s857 + $0x20] sm:$0xff] %vm576, %v848
        %863 = vst.msk [vmem:[%s857 + $0x28] sm:$0xff] %vm576, %v850
        %864 = vst.msk [vmem:[%s857 + $0x30] sm:$0xff] %vm576, %v853
        %865 = vst.msk [vmem:[%s857 + $0x38] sm:$0xff] %vm576, %v855
        %v866 = vsel %vm576, %v838, 0.0
        %v867 = vsel %vm576, %v840, 0.0
        %v868 = vadd.f32 %v866, %v867
        %v869 = vsel %vm576, %v843, 0.0
        %v870 = vadd.f32 %v868, %v869
        %v871 = vsel %vm576, %v845, 0.0
        %v872 = vadd.f32 %v870, %v871
        %v873 = vsel %vm576, %v848, 0.0
        %v874 = vadd.f32 %v872, %v873
        %v875 = vsel %vm576, %v850, 0.0
        %v876 = vadd.f32 %v874, %v875
        %v877 = vsel %vm576, %v853, 0.0
        %v878 = vadd.f32 %v876, %v877
        %v879 = vsel %vm576, %v855, 0.0
        %v880 = vadd.f32 %v878, %v879
        %v881 = vrot.slane %v880, 4
        %v882 = vadd.f32 %v880, %v881
        %v883 = vrot.slane %v882, 2
        %v884 = vadd.f32 %v882, %v883
        %v885 = vrot.slane %v884, 1
        %v886 = vadd.f32 %v884, %v885
        %v887 = vadd.f32 %v678, %v886
        %v888 = vmul.f32 %v838, %v838
        %v889 = vmul.f32 %v840, %v840
        %v890 = vmul.f32 %v843, %v843
        %v891 = vmul.f32 %v845, %v845
        %v892 = vmul.f32 %v848, %v848
        %v893 = vmul.f32 %v850, %v850
        %v894 = vmul.f32 %v853, %v853
        %v895 = vmul.f32 %v855, %v855
        %v896 = vsel %vm576, %v888, 0.0
        %v897 = vsel %vm576, %v889, 0.0
        %v898 = vadd.f32 %v896, %v897
        %v899 = vsel %vm576, %v890, 0.0
        %v900 = vadd.f32 %v898, %v899
        %v901 = vsel %vm576, %v891, 0.0
        %v902 = vadd.f32 %v900, %v901
        %v903 = vsel %vm576, %v892, 0.0
        %v904 = vadd.f32 %v902, %v903
        %v905 = vsel %vm576, %v893, 0.0
        %v906 = vadd.f32 %v904, %v905
        %v907 = vsel %vm576, %v894, 0.0
        %v908 = vadd.f32 %v906, %v907
        %v909 = vsel %vm576, %v895, 0.0
        %v910 = vadd.f32 %v908, %v909
        %v911 = vrot.slane %v910, 4
        %v912 = vadd.f32 %v910, %v911
        %v913 = vrot.slane %v912, 2
        %v914 = vadd.f32 %v912, %v913
        %v915 = vrot.slane %v914, 1
        %v916 = vadd.f32 %v914, %v915
        %v917 = vadd.f32 %v708, %v916
        %918 = vrot.lane.b32.xlu0 %v567, 4
        %v919 = vpop.permute.xlu0 %918
        %v922 = vunpack.c.l.b16 %v448
        %v923 = vunpack.c.l.b16 %v449
        %v924 = vpack.c.b16 %v923, %v922
        %925 = vrot.lane.b32.xlu0 %v924, 8
        %v926 = vpop.permute.xlu0 %925
        %v928 = vunpack.c.l.b16 %v450
        %v929 = vpack.c.b16 %v928, %v928
        %v931 = vshrl.u32 %v924, 16
        %v933 = vshll.u32 %v924, 16
        %v935 = vrot.slane %v933, 1
        %v936 = vor.u32 %v931, %v935
        %v938 = vshll.u32 %v929, 16
        %v940 = vrot.slane %v938, 1
        %v941 = vsel %vm483, %v936, %v940
        %942 = vrot.lane.b32.xlu0 %v941, 12
        %v943 = vpop.permute.xlu0 %942
        %v945 = vsel %vm576, %v544, %v919
        %v947 = vsel %vm585, %v945, %v926
        %v949 = vsel %vm594, %v947, %v943
        %s950 = scalar_lea.vmem %s417, 16
        %v951 = vld [vmem:[%s950] sm:$0xf]
        %v952 = vld [vmem:[%s950 + $0x4] sm:$0xf]
        %v955 = vunpack.c.l.b16 %v951
        %v956 = vunpack.c.l.b16 %v952
        %v957 = vpack.c.b16 %v956, %v955
        %v959 = vsel %vm611, %v949, 0
        %961 = vmatpush.bf16.msra.mxu0 0
        %962 = vmatpush.bf16.msra.mxu0 0
        %963 = vmatpush.bf16.msra.mxu0 0
        %964 = vmatpush.bf16.msra.mxu0 0
        %965 = vmatpush.bf16.msra.mxu0 0
        %966 = vmatpush.bf16.msra.mxu0 0
        %967 = vmatpush.bf16.msra.mxu0 0
        %968 = vmatpush.bf16.msra.mxu0 %v957
        %969 = vmatmul.bf16.gmra.mxu0 %v614
        %v970 = vpop.f32.mrf.mxu0
        %v971 = vadd.f32 0.0, %v970
        %v972 = vpop.f32.mrf.mxu0
        %v973 = vadd.f32 0.0, %v972
        %974 = vmatmul.bf16.gmra.mxu0 %v616
        %v975 = vpop.f32.mrf.mxu0
        %v976 = vadd.f32 0.0, %v975
        %v977 = vpop.f32.mrf.mxu0
        %v978 = vadd.f32 0.0, %v977
        %979 = vmatmul.bf16.gmra.mxu0 %v618
        %v980 = vpop.f32.mrf.mxu0
        %v981 = vadd.f32 0.0, %v980
        %v982 = vpop.f32.mrf.mxu0
        %v983 = vadd.f32 0.0, %v982
        %984 = vmatmul.bf16.gmra.mxu0 %v959
        %v985 = vpop.f32.mrf.mxu0
        %v986 = vadd.f32 0.0, %v985
        %v987 = vpop.f32.mrf.mxu0
        %v988 = vadd.f32 0.0, %v987
        %989 = vdwg.mxu0
        %s990 = scalar_lea.vmem %s355, 128 [#allocation2]
        %991 = vst.msk [vmem:[%s990] sm:$0xff] %vm576, %v971
        %992 = vst.msk [vmem:[%s990 + $0x8] sm:$0xff] %vm576, %v973
        %993 = vst.msk [vmem:[%s990 + $0x10] sm:$0xff] %vm576, %v976
        %994 = vst.msk [vmem:[%s990 + $0x18] sm:$0xff] %vm576, %v978
        %995 = vst.msk [vmem:[%s990 + $0x20] sm:$0xff] %vm576, %v981
        %996 = vst.msk [vmem:[%s990 + $0x28] sm:$0xff] %vm576, %v983
        %997 = vst.msk [vmem:[%s990 + $0x30] sm:$0xff] %vm576, %v986
        %998 = vst.msk [vmem:[%s990 + $0x38] sm:$0xff] %vm576, %v988
        %v999 = vsel %vm576, %v971, 0.0
        %v1000 = vsel %vm576, %v973, 0.0
        %v1001 = vadd.f32 %v999, %v1000
        %v1002 = vsel %vm576, %v976, 0.0
        %v1003 = vadd.f32 %v1001, %v1002
        %v1004 = vsel %vm576, %v978, 0.0
        %v1005 = vadd.f32 %v1003, %v1004
        %v1006 = vsel %vm576, %v981, 0.0
        %v1007 = vadd.f32 %v1005, %v1006
        %v1008 = vsel %vm576, %v983, 0.0
        %v1009 = vadd.f32 %v1007, %v1008
        %v1010 = vsel %vm576, %v986, 0.0
        %v1011 = vadd.f32 %v1009, %v1010
        %v1012 = vsel %vm576, %v988, 0.0
        %v1013 = vadd.f32 %v1011, %v1012
        %v1014 = vrot.slane %v1013, 4
        %v1015 = vadd.f32 %v1013, %v1014
        %v1016 = vrot.slane %v1015, 2
        %v1017 = vadd.f32 %v1015, %v1016
        %v1018 = vrot.slane %v1017, 1
        %v1019 = vadd.f32 %v1017, %v1018
        %v1020 = vadd.f32 %v887, %v1019
        %v1021 = vmul.f32 %v971, %v971
        %v1022 = vmul.f32 %v973, %v973
        %v1023 = vmul.f32 %v976, %v976
        %v1024 = vmul.f32 %v978, %v978
        %v1025 = vmul.f32 %v981, %v981
        %v1026 = vmul.f32 %v983, %v983
        %v1027 = vmul.f32 %v986, %v986
        %v1028 = vmul.f32 %v988, %v988
        %v1029 = vsel %vm576, %v1021, 0.0
        %v1030 = vsel %vm576, %v1022, 0.0
        %v1031 = vadd.f32 %v1029, %v1030
        %v1032 = vsel %vm576, %v1023, 0.0
        %v1033 = vadd.f32 %v1031, %v1032
        %v1034 = vsel %vm576, %v1024, 0.0
        %v1035 = vadd.f32 %v1033, %v1034
        %v1036 = vsel %vm576, %v1025, 0.0
        %v1037 = vadd.f32 %v1035, %v1036
        %v1038 = vsel %vm576, %v1026, 0.0
        %v1039 = vadd.f32 %v1037, %v1038
        %v1040 = vsel %vm576, %v1027, 0.0
        %v1041 = vadd.f32 %v1039, %v1040
        %v1042 = vsel %vm576, %v1028, 0.0
        %v1043 = vadd.f32 %v1041, %v1042
        %v1044 = vrot.slane %v1043, 4
        %v1045 = vadd.f32 %v1043, %v1044
        %v1046 = vrot.slane %v1045, 2
        %v1047 = vadd.f32 %v1045, %v1046
        %v1048 = vrot.slane %v1047, 1
        %v1049 = vadd.f32 %v1047, %v1048
        %v1050 = vadd.f32 %v917, %v1049
        %1051 = vrot.lane.b32.xlu0 %v733, 4
        %v1052 = vpop.permute.xlu0 %1051
        %1053 = vrot.lane.b32.xlu0 %v929, 8
        %v1054 = vpop.permute.xlu0 %1053
        %v1055 = vshrl.u32 %v929, 16
        %1057 = vrot.lane.b32.xlu0 %v1055, 12
        %v1058 = vpop.permute.xlu0 %1057
        %v1060 = vsel %vm576, %v555, %v1052
        %v1062 = vsel %vm585, %v1060, %v1054
        %v1064 = vsel %vm594, %v1062, %v1058
        %v1065 = vshrl.u32 %v949, 16
        %v1067 = vshll.u32 %v949, 16
        %v1069 = vrot.slane %v1067, 1
        %v1070 = vor.u32 %v1065, %v1069
        %v1071 = vshll.u32 %v1064, 16
        %v1073 = vrot.slane %v1071, 1
        %v1074 = vsel %vm483, %v1070, %v1073
        %s1075 = scalar_lea.vmem %s417, 24
        %v1076 = vld [vmem:[%s1075] sm:$0xf]
        %v1077 = vld [vmem:[%s1075 + $0x4] sm:$0xf]
        %v1080 = vunpack.c.l.b16 %v1076
        %v1081 = vunpack.c.l.b16 %v1077
        %v1082 = vpack.c.b16 %v1081, %v1080
        %v1085 = vsel %vm611, %v1074, 0
        %1087 = vmatpush.bf16.msra.mxu0 0
        %1088 = vmatpush.bf16.msra.mxu0 0
        %1089 = vmatpush.bf16.msra.mxu0 0
        %1090 = vmatpush.bf16.msra.mxu0 0
        %1091 = vmatpush.bf16.msra.mxu0 0
        %1092 = vmatpush.bf16.msra.mxu0 0
        %1093 = vmatpush.bf16.msra.mxu0 0
        %1094 = vmatpush.bf16.msra.mxu0 %v1082
        %1095 = vmatmul.bf16.gmra.mxu0 %v820
        %v1096 = vpop.f32.mrf.mxu0
        %v1097 = vadd.f32 0.0, %v1096
        %v1098 = vpop.f32.mrf.mxu0
        %v1099 = vadd.f32 0.0, %v1098
        %1100 = vmatmul.bf16.gmra.mxu0 %v823
        %v1101 = vpop.f32.mrf.mxu0
        %v1102 = vadd.f32 0.0, %v1101
        %v1103 = vpop.f32.mrf.mxu0
        %v1104 = vadd.f32 0.0, %v1103
        %1105 = vmatmul.bf16.gmra.mxu0 %v826
        %v1106 = vpop.f32.mrf.mxu0
        %v1107 = vadd.f32 0.0, %v1106
        %v1108 = vpop.f32.mrf.mxu0
        %v1109 = vadd.f32 0.0, %v1108
        %1110 = vmatmul.bf16.gmra.mxu0 %v1085
        %v1111 = vpop.f32.mrf.mxu0
        %v1112 = vadd.f32 0.0, %v1111
        %v1113 = vpop.f32.mrf.mxu0
        %v1114 = vadd.f32 0.0, %v1113
        %1115 = vdwg.mxu0
        %s1116 = scalar_lea.vmem %s355, 192 [#allocation2]
        %1117 = vst.msk [vmem:[%s1116] sm:$0xff] %vm576, %v1097
        %1118 = vst.msk [vmem:[%s1116 + $0x8] sm:$0xff] %vm576, %v1099
        %1119 = vst.msk [vmem:[%s1116 + $0x10] sm:$0xff] %vm576, %v1102
        %1120 = vst.msk [vmem:[%s1116 + $0x18] sm:$0xff] %vm576, %v1104
        %1121 = vst.msk [vmem:[%s1116 + $0x20] sm:$0xff] %vm576, %v1107
        %1122 = vst.msk [vmem:[%s1116 + $0x28] sm:$0xff] %vm576, %v1109
        %1123 = vst.msk [vmem:[%s1116 + $0x30] sm:$0xff] %vm576, %v1112
        %1124 = vst.msk [vmem:[%s1116 + $0x38] sm:$0xff] %vm576, %v1114
        %v1125 = vsel %vm576, %v1097, 0.0
        %v1126 = vsel %vm576, %v1099, 0.0
        %v1127 = vadd.f32 %v1125, %v1126
        %v1128 = vsel %vm576, %v1102, 0.0
        %v1129 = vadd.f32 %v1127, %v1128
        %v1130 = vsel %vm576, %v1104, 0.0
        %v1131 = vadd.f32 %v1129, %v1130
        %v1132 = vsel %vm576, %v1107, 0.0
        %v1133 = vadd.f32 %v1131, %v1132
        %v1134 = vsel %vm576, %v1109, 0.0
        %v1135 = vadd.f32 %v1133, %v1134
        %v1136 = vsel %vm576, %v1112, 0.0
        %v1137 = vadd.f32 %v1135, %v1136
        %v1138 = vsel %vm576, %v1114, 0.0
        %v1139 = vadd.f32 %v1137, %v1138
        %v1140 = vrot.slane %v1139, 4
        %v1141 = vadd.f32 %v1139, %v1140
        %v1142 = vrot.slane %v1141, 2
        %v1143 = vadd.f32 %v1141, %v1142
        %v1144 = vrot.slane %v1143, 1
        %v1145 = vadd.f32 %v1143, %v1144
        %v1146 = vadd.f32 %v1020, %v1145
        %v1147 = vmul.f32 %v1097, %v1097
        %v1148 = vmul.f32 %v1099, %v1099
        %v1149 = vmul.f32 %v1102, %v1102
        %v1150 = vmul.f32 %v1104, %v1104
        %v1151 = vmul.f32 %v1107, %v1107
        %v1152 = vmul.f32 %v1109, %v1109
        %v1153 = vmul.f32 %v1112, %v1112
        %v1154 = vmul.f32 %v1114, %v1114
        %v1155 = vsel %vm576, %v1147, 0.0
        %v1156 = vsel %vm576, %v1148, 0.0
        %v1157 = vadd.f32 %v1155, %v1156
        %v1158 = vsel %vm576, %v1149, 0.0
        %v1159 = vadd.f32 %v1157, %v1158
        %v1160 = vsel %vm576, %v1150, 0.0
        %v1161 = vadd.f32 %v1159, %v1160
        %v1162 = vsel %vm576, %v1151, 0.0
        %v1163 = vadd.f32 %v1161, %v1162
        %v1164 = vsel %vm576, %v1152, 0.0
        %v1165 = vadd.f32 %v1163, %v1164
        %v1166 = vsel %vm576, %v1153, 0.0
        %v1167 = vadd.f32 %v1165, %v1166
        %v1168 = vsel %vm576, %v1154, 0.0
        %v1169 = vadd.f32 %v1167, %v1168
        %v1170 = vrot.slane %v1169, 4
        %v1171 = vadd.f32 %v1169, %v1170
        %v1172 = vrot.slane %v1171, 2
        %v1173 = vadd.f32 %v1171, %v1172
        %v1174 = vrot.slane %v1173, 1
        %v1175 = vadd.f32 %v1173, %v1174
        %v1176 = vadd.f32 %v1050, %v1175
        %v1177 = vld [vmem:[%s425] sm:$0x3]
        %vm1178 = vcmask 1040384
        %v1179 = vsel %vm1178, %v1146, %v1176
        %v1180 = vadd.f32 %v1177, %v1179
        %vm1181 = vcmask 25600
        %1182 = vst.msk [vmem:[%s425] sm:$0x3] %vm1181, %v1180
        %s1183 = sand.u32 %s168, 1
        %s1184 = sand.u32 %s168, 1
        %s1185 = smul.addr %s1184, 256
        %s1186 = scalar_lea.vmem [#allocation2], %s1185
        %p1187 = scmp.lt.s32.totalorder %s22, 1
        %s1188 = scalar_select %p1187, %s22, 1
        %p1189 = scmp.lt.s32.totalorder %s23, 0
        %s1190 = scalar_select %p1189, %s23, 0
        %s1191 = sadd.s32 %s1190, %s1188
        %s1192 = smul.addr %s1191, 2
        %s1193 = scalar_lea.vmem %s5, %s1192
        // Predicated region
        $region41: #{up_conv_forward.2} parent=35 // pred_check
          %p1194 = pneg %p178
        $region42: #{up_conv_forward.2} parent=35 // pred_check_branch
          %1196 = sbr.rel (%p1194) target = $region44
        $region43: #{up_conv_forward.2} parent=35 // pred_region
          %s1197 = smul.u32 4, %s24
          %s1198 = smul.addr %s1197, 2
          %s1199 = sadd.s32 %s23, %s1198
          %s1200 = smul.addr %s22, 128
          %s1201 = sadd.s32 %s1199, %s1200
          %s1202 = smul.addr %s1201, 8
          %s1203 = scalar_lea.vmem %s4, %s1202
          // Predicated region
          $region45: #{up_conv_forward.2} parent=43 // pred_check
            _
          $region46: #{up_conv_forward.2} parent=43 // pred_check_branch
            %1205 = sbr.rel (0) target = $region48
          $region47: #{up_conv_forward.2} parent=43 // pred_region
            // Predicated region
            $region49: #{up_conv_forward.2} parent=47 // pred_check
              _
            $region50: #{up_conv_forward.2} parent=47 // pred_check_branch
              %1207 = sbr.rel (0) target = $region52
            $region51: #{up_conv_forward.2} parent=47 // pred_region
              // Predicated region
              $region64: #{up_conv_forward.2} parent=51 // pred_check
                _
              $region65: #{up_conv_forward.2} parent=51 // pred_check_branch
                %1285 = sbr.rel (0) target = $region67
              $region66: #{up_conv_forward.2} parent=51 // pred_region
                loop: start=0, step=1, limit=1
                $region68: #{up_conv_forward.2} parent=66 // loop_pre_header
                  _
                $region69: #{up_conv_forward.2} parent=66 // loop_header
                  %s1287 = sphi 0, %s1291
                  %p1288 = scmp.ge.s32.totalorder %s1287, 1
                  %s1292 = sphi %s1186, %s1186
                  %s1293 = sphi %s1203, %s1203
                $region70: #{up_conv_forward.2} parent=66 // loop_header_branch
                  %1290 = sbr.rel (%p1288) target = $region74
                $region71: #{up_conv_forward.2} parent=66 // loop_body
                  %v1294 = vld [vmem:[%s1292] sm:$0xff]
                  %1295 = vst [vmem:[%s1293] sm:$0xff] %v1294
                  %v1296 = vld [vmem:[%s1292 + $0x8] sm:$0xff]
                  %1297 = vst [vmem:[%s1293 + $0x8] sm:$0xff] %v1296
                  %v1298 = vld [vmem:[%s1292 + $0x10] sm:$0xff]
                  %1299 = vst [vmem:[%s1293 + $0x10] sm:$0xff] %v1298
                  %v1300 = vld [vmem:[%s1292 + $0x18] sm:$0xff]
                  %1301 = vst [vmem:[%s1293 + $0x18] sm:$0xff] %v1300
                  %v1302 = vld [vmem:[%s1292 + $0x20] sm:$0xff]
                  %1303 = vst [vmem:[%s1293 + $0x20] sm:$0xff] %v1302
                  %v1304 = vld [vmem:[%s1292 + $0x28] sm:$0xff]
                  %1305 = vst [vmem:[%s1293 + $0x28] sm:$0xff] %v1304
                  %v1306 = vld [vmem:[%s1292 + $0x30] sm:$0xff]
                  %1307 = vst [vmem:[%s1293 + $0x30] sm:$0xff] %v1306
                  %v1308 = vld [vmem:[%s1292 + $0x38] sm:$0xff]
                  %1309 = vst [vmem:[%s1293 + $0x38] sm:$0xff] %v1308
                  %v1310 = vld [vmem:[%s1292 + $0x40] sm:$0xff]
                  %1311 = vst [vmem:[%s1293 + $0x100] sm:$0xff] %v1310
                  %v1312 = vld [vmem:[%s1292 + $0x48] sm:$0xff]
                  %1313 = vst [vmem:[%s1293 + $0x108] sm:$0xff] %v1312
                  %v1314 = vld [vmem:[%s1292 + $0x50] sm:$0xff]
                  %1315 = vst [vmem:[%s1293 + $0x110] sm:$0xff] %v1314
                  %v1316 = vld [vmem:[%s1292 + $0x58] sm:$0xff]
                  %1317 = vst [vmem:[%s1293 + $0x118] sm:$0xff] %v1316
                  %v1318 = vld [vmem:[%s1292 + $0x60] sm:$0xff]
                  %1319 = vst [vmem:[%s1293 + $0x120] sm:$0xff] %v1318
                  %v1320 = vld [vmem:[%s1292 + $0x68] sm:$0xff]
                  %1321 = vst [vmem:[%s1293 + $0x128] sm:$0xff] %v1320
                  %v1322 = vld [vmem:[%s1292 + $0x70] sm:$0xff]
                  %1323 = vst [vmem:[%s1293 + $0x130] sm:$0xff] %v1322
                  %v1324 = vld [vmem:[%s1292 + $0x78] sm:$0xff]
                  %1325 = vst [vmem:[%s1293 + $0x138] sm:$0xff] %v1324
                  %v1326 = vld [vmem:[%s1292 + $0x80] sm:$0xff]
                  %1327 = vst [vmem:[%s1293 + $0x200] sm:$0xff] %v1326
                  %v1328 = vld [vmem:[%s1292 + $0x88] sm:$0xff]
                  %1329 = vst [vmem:[%s1293 + $0x208] sm:$0xff] %v1328
                  %v1330 = vld [vmem:[%s1292 + $0x90] sm:$0xff]
                  %1331 = vst [vmem:[%s1293 + $0x210] sm:$0xff] %v1330
                  %v1332 = vld [vmem:[%s1292 + $0x98] sm:$0xff]
                  %1333 = vst [vmem:[%s1293 + $0x218] sm:$0xff] %v1332
                  %v1334 = vld [vmem:[%s1292 + $0xa0] sm:$0xff]
                  %1335 = vst [vmem:[%s1293 + $0x220] sm:$0xff] %v1334
                  %v1336 = vld [vmem:[%s1292 + $0xa8] sm:$0xff]
                  %1337 = vst [vmem:[%s1293 + $0x228] sm:$0xff] %v1336
                  %v1338 = vld [vmem:[%s1292 + $0xb0] sm:$0xff]
                  %1339 = vst [vmem:[%s1293 + $0x230] sm:$0xff] %v1338
                  %v1340 = vld [vmem:[%s1292 + $0xb8] sm:$0xff]
                  %1341 = vst [vmem:[%s1293 + $0x238] sm:$0xff] %v1340
                  %v1342 = vld [vmem:[%s1292 + $0xc0] sm:$0xff]
                  %1343 = vst [vmem:[%s1293 + $0x300] sm:$0xff] %v1342
                  %v1344 = vld [vmem:[%s1292 + $0xc8] sm:$0xff]
                  %1345 = vst [vmem:[%s1293 + $0x308] sm:$0xff] %v1344
                  %v1346 = vld [vmem:[%s1292 + $0xd0] sm:$0xff]
                  %1347 = vst [vmem:[%s1293 + $0x310] sm:$0xff] %v1346
                  %v1348 = vld [vmem:[%s1292 + $0xd8] sm:$0xff]
                  %1349 = vst [vmem:[%s1293 + $0x318] sm:$0xff] %v1348
                  %v1350 = vld [vmem:[%s1292 + $0xe0] sm:$0xff]
                  %1351 = vst [vmem:[%s1293 + $0x320] sm:$0xff] %v1350
                  %v1352 = vld [vmem:[%s1292 + $0xe8] sm:$0xff]
                  %1353 = vst [vmem:[%s1293 + $0x328] sm:$0xff] %v1352
                  %v1354 = vld [vmem:[%s1292 + $0xf0] sm:$0xff]
                  %1355 = vst [vmem:[%s1293 + $0x330] sm:$0xff] %v1354
                  %v1356 = vld [vmem:[%s1292 + $0xf8] sm:$0xff]
                  %1357 = vst [vmem:[%s1293 + $0x338] sm:$0xff] %v1356
                $region72: #{up_conv_forward.2} parent=66 // loop_footer
                  %s1291 = sadd.s32 1, %s1287
                $region73: #{up_conv_forward.2} parent=66 // loop_footer_branch
                  %1286 = sbr.rel target = $region69
                $region74: #{up_conv_forward.2} parent=66 // loop_exit
                  _
              $region67: #{up_conv_forward.2} parent=51 // pred_fallthru
                _
              // Predicated region
              $region75: #{up_conv_forward.2} parent=51 // pred_check
                _
              $region76: #{up_conv_forward.2} parent=51 // pred_check_branch
                %1359 = sbr.rel target = $region78
              $region77: #{up_conv_forward.2} parent=51 // pred_region
                _
              $region78: #{up_conv_forward.2} parent=51 // pred_fallthru
                _
            $region52: #{up_conv_forward.2} parent=47 // pred_fallthru
              _
            // Predicated region
            $region53: #{up_conv_forward.2} parent=47 // pred_check
              _
            $region54: #{up_conv_forward.2} parent=47 // pred_check_branch
              %1209 = sbr.rel target = $region56
            $region55: #{up_conv_forward.2} parent=47 // pred_region
              %s1211 = ssub.s32 256, 1
              loop: start=0, step=1, limit=1
              $region57: #{up_conv_forward.2} parent=55 // loop_pre_header
                _
              $region58: #{up_conv_forward.2} parent=55 // loop_header
                %s1213 = sphi 0, %s1217
                %p1214 = scmp.ge.s32.totalorder %s1213, 1
                %s1218 = sphi %s1186, %s1186
                %s1219 = sphi %s1203, %s1203
              $region59: #{up_conv_forward.2} parent=55 // loop_header_branch
                %1216 = sbr.rel (%p1214) target = $region63
              $region60: #{up_conv_forward.2} parent=55 // loop_body
                %v1220 = vld [vmem:[%s1218] sm:%s1211]
                %1221 = vst [vmem:[%s1219] sm:%s1211] %v1220
                %v1222 = vld [vmem:[%s1218 + $0x8] sm:%s1211]
                %1223 = vst [vmem:[%s1219 + $0x8] sm:%s1211] %v1222
                %v1224 = vld [vmem:[%s1218 + $0x10] sm:%s1211]
                %1225 = vst [vmem:[%s1219 + $0x10] sm:%s1211] %v1224
                %v1226 = vld [vmem:[%s1218 + $0x18] sm:%s1211]
                %1227 = vst [vmem:[%s1219 + $0x18] sm:%s1211] %v1226
                %v1228 = vld [vmem:[%s1218 + $0x20] sm:%s1211]
                %1229 = vst [vmem:[%s1219 + $0x20] sm:%s1211] %v1228
                %v1230 = vld [vmem:[%s1218 + $0x28] sm:%s1211]
                %1231 = vst [vmem:[%s1219 + $0x28] sm:%s1211] %v1230
                %v1232 = vld [vmem:[%s1218 + $0x30] sm:%s1211]
                %1233 = vst [vmem:[%s1219 + $0x30] sm:%s1211] %v1232
                %v1234 = vld [vmem:[%s1218 + $0x38] sm:%s1211]
                %1235 = vst [vmem:[%s1219 + $0x38] sm:%s1211] %v1234
                %v1236 = vld [vmem:[%s1218 + $0x40] sm:%s1211]
                %1237 = vst [vmem:[%s1219 + $0x100] sm:%s1211] %v1236
                %v1238 = vld [vmem:[%s1218 + $0x48] sm:%s1211]
                %1239 = vst [vmem:[%s1219 + $0x108] sm:%s1211] %v1238
                %v1240 = vld [vmem:[%s1218 + $0x50] sm:%s1211]
                %1241 = vst [vmem:[%s1219 + $0x110] sm:%s1211] %v1240
                %v1242 = vld [vmem:[%s1218 + $0x58] sm:%s1211]
                %1243 = vst [vmem:[%s1219 + $0x118] sm:%s1211] %v1242
                %v1244 = vld [vmem:[%s1218 + $0x60] sm:%s1211]
                %1245 = vst [vmem:[%s1219 + $0x120] sm:%s1211] %v1244
                %v1246 = vld [vmem:[%s1218 + $0x68] sm:%s1211]
                %1247 = vst [vmem:[%s1219 + $0x128] sm:%s1211] %v1246
                %v1248 = vld [vmem:[%s1218 + $0x70] sm:%s1211]
                %1249 = vst [vmem:[%s1219 + $0x130] sm:%s1211] %v1248
                %v1250 = vld [vmem:[%s1218 + $0x78] sm:%s1211]
                %1251 = vst [vmem:[%s1219 + $0x138] sm:%s1211] %v1250
                %v1252 = vld [vmem:[%s1218 + $0x80] sm:%s1211]
                %1253 = vst [vmem:[%s1219 + $0x200] sm:%s1211] %v1252
                %v1254 = vld [vmem:[%s1218 + $0x88] sm:%s1211]
                %1255 = vst [vmem:[%s1219 + $0x208] sm:%s1211] %v1254
                %v1256 = vld [vmem:[%s1218 + $0x90] sm:%s1211]
                %1257 = vst [vmem:[%s1219 + $0x210] sm:%s1211] %v1256
                %v1258 = vld [vmem:[%s1218 + $0x98] sm:%s1211]
                %1259 = vst [vmem:[%s1219 + $0x218] sm:%s1211] %v1258
                %v1260 = vld [vmem:[%s1218 + $0xa0] sm:%s1211]
                %1261 = vst [vmem:[%s1219 + $0x220] sm:%s1211] %v1260
                %v1262 = vld [vmem:[%s1218 + $0xa8] sm:%s1211]
                %1263 = vst [vmem:[%s1219 + $0x228] sm:%s1211] %v1262
                %v1264 = vld [vmem:[%s1218 + $0xb0] sm:%s1211]
                %1265 = vst [vmem:[%s1219 + $0x230] sm:%s1211] %v1264
                %v1266 = vld [vmem:[%s1218 + $0xb8] sm:%s1211]
                %1267 = vst [vmem:[%s1219 + $0x238] sm:%s1211] %v1266
                %v1268 = vld [vmem:[%s1218 + $0xc0] sm:%s1211]
                %1269 = vst [vmem:[%s1219 + $0x300] sm:%s1211] %v1268
                %v1270 = vld [vmem:[%s1218 + $0xc8] sm:%s1211]
                %1271 = vst [vmem:[%s1219 + $0x308] sm:%s1211] %v1270
                %v1272 = vld [vmem:[%s1218 + $0xd0] sm:%s1211]
                %1273 = vst [vmem:[%s1219 + $0x310] sm:%s1211] %v1272
                %v1274 = vld [vmem:[%s1218 + $0xd8] sm:%s1211]
                %1275 = vst [vmem:[%s1219 + $0x318] sm:%s1211] %v1274
                %v1276 = vld [vmem:[%s1218 + $0xe0] sm:%s1211]
                %1277 = vst [vmem:[%s1219 + $0x320] sm:%s1211] %v1276
                %v1278 = vld [vmem:[%s1218 + $0xe8] sm:%s1211]
                %1279 = vst [vmem:[%s1219 + $0x328] sm:%s1211] %v1278
                %v1280 = vld [vmem:[%s1218 + $0xf0] sm:%s1211]
                %1281 = vst [vmem:[%s1219 + $0x330] sm:%s1211] %v1280
                %v1282 = vld [vmem:[%s1218 + $0xf8] sm:%s1211]
                %1283 = vst [vmem:[%s1219 + $0x338] sm:%s1211] %v1282
              $region61: #{up_conv_forward.2} parent=55 // loop_footer
                %s1217 = sadd.s32 1, %s1213
              $region62: #{up_conv_forward.2} parent=55 // loop_footer_branch
                %1212 = sbr.rel target = $region58
              $region63: #{up_conv_forward.2} parent=55 // loop_exit
                _
            $region56: #{up_conv_forward.2} parent=47 // pred_fallthru
              _
          $region48: #{up_conv_forward.2} parent=43 // pred_fallthru
            _
          %1360 = vnop
        $region44: #{up_conv_forward.2} parent=35 // pred_fallthru
          _
        // Predicated region
        $region79: #{up_conv_forward.2} parent=35 // pred_check
          %p1361 = pneg %p206
        $region80: #{up_conv_forward.2} parent=35 // pred_check_branch
          %1363 = sbr.rel (%p1361) target = $region82
        $region81: #{up_conv_forward.2} parent=35 // pred_region
          _
        $region82: #{up_conv_forward.2} parent=35 // pred_fallthru
          _
      $region36: #{up_conv_forward.2} parent=5 // pred_fallthru
        _
      %p1364 = scmp.le.s32.totalorder 2, %s12
      // Predicated region
      $region83: #{up_conv_forward.2} parent=5 // pred_check
        %p1365 = pneg %p1364
      $region84: #{up_conv_forward.2} parent=5 // pred_check_branch
        %1367 = sbr.rel (%p1365) target = $region86
      $region85: #{up_conv_forward.2} parent=5 // pred_region
        %s1368 = ssub.s32 %s12, 2
        // Predicated region
        $region87: #{up_conv_forward.2} parent=85 // pred_check
          %p1369 = pneg %p184
        $region88: #{up_conv_forward.2} parent=85 // pred_check_branch
          %1371 = sbr.rel (%p1369) target = $region90
        $region89: #{up_conv_forward.2} parent=85 // pred_region
          %s1372 = sand.u32 %s169, 1
          %s1373 = sand.u32 %s169, 1
          %s1374 = smul.addr %s1373, 256
          %s1375 = scalar_lea.vmem [#allocation2], %s1374
        $region90: #{up_conv_forward.2} parent=85 // pred_fallthru
          _
        // Predicated region
        $region91: #{up_conv_forward.2} parent=85 // pred_check
          %p1376 = pneg %p212
        $region92: #{up_conv_forward.2} parent=85 // pred_check_branch
          %1378 = sbr.rel (%p1376) target = $region94
        $region93: #{up_conv_forward.2} parent=85 // pred_region
          %p1379 = scmp.lt.s32.totalorder %s25, 1
          %s1380 = scalar_select %p1379, %s25, 1
          %p1381 = scmp.lt.s32.totalorder %s26, 0
          %s1382 = scalar_select %p1381, %s26, 0
          %s1383 = sadd.s32 %s1382, %s1380
          %s1384 = smul.addr %s1383, 2
          %s1385 = scalar_lea.vmem %s5, %s1384
        $region94: #{up_conv_forward.2} parent=85 // pred_fallthru
          _
      $region86: #{up_conv_forward.2} parent=5 // pred_fallthru
        _
    $region6: #{up_conv_forward.2} parent=1 // loop_footer
      %s16 = sadd.s32 1, %s12
    $region7: #{up_conv_forward.2} parent=1 // loop_footer_branch
      %11 = sbr.rel target = $region3
    $region8: #{up_conv_forward.2} parent=1 // loop_exit
      _

</llo_original>
